<compile_context>
chip_gen: v7x
topology: tpu7x:2x2x1
jax: 0.10.0
libtpu: 0.0.40
codegen_flags: <defaults>
</compile_context>

<pallas_src>
import functools
import math

import jax
import jax.numpy as jnp
from jax.experimental import pallas as pl
from jax.experimental.pallas import tpu as pltpu

TAU = 1.0          # MemPooling tau (PyG default)
BN_EPS = 1e-5      # BatchNorm eps (torch default)
LANE = 128
SUBLANE = 8


def _round_up(v, m):
    return (v + m - 1) // m * m


# ----------------------------------------------------------------------------
# Fused kernel: MemPooling + head MLP, TB graphs per grid step
# ----------------------------------------------------------------------------
def _fused_kernel(x_ref, selm_ref, kf_ref, ksq_ref, msum_ref, wmix_ref,
                  w1f_ref, b1_ref, w2_ref, b2_ref, w3_ref, b3_ref,
                  w4_ref, b4_ref, wo_ref, bo_ref, out_ref, *, clusters):
    tb, n, c = x_ref.shape
    x = x_ref[...].reshape(tb * n, c)            # (TB*N, Cp): all node rows
    selm = selm_ref[...].reshape(tb * n, tb)     # (TB*N, TB): mask * graph 1-hot
    kf = kf_ref[...]                             # (H*K, Cp)  cluster keys

    # ||x - k||^2 via the MXU expansion (one matmul with M = TB*N rows).
    # NOTE: slightly less accurate than explicit differences; clamp guards
    # tiny negatives.  ||k||^2 is precomputed on the host.
    xk = jax.lax.dot_general(x, kf, (((1,), (1,)), ((), ())),
                             preferred_element_type=jnp.float32)      # (TB*N, H*K)
    x_sq = jnp.sum(x * x, axis=-1, keepdims=True)                     # (TB*N, 1)
    dist2 = jnp.maximum(x_sq + ksq_ref[...] - 2.0 * xk, 0.0)

    # student-t kernel; tau == 1 -> plain reciprocal on the EUP
    if TAU == 1.0:
        t = pl.reciprocal(1.0 + dist2, approx=True)
    else:
        t = jnp.power(1.0 + dist2 / TAU, -(TAU + 1.0) / 2.0)

    # per-head cluster normalisation + 1x1-conv head mixing, vectorised as two
    # small matmuls (no per-head lane slicing).
    denom = jnp.dot(t, msum_ref[...], preferred_element_type=jnp.float32)
    t = t * pl.reciprocal(denom, approx=True)
    s_raw = jnp.dot(t, wmix_ref[...], preferred_element_type=jnp.float32)  # (TB*N, K)

    # softmax over clusters
    e = jnp.exp(s_raw - jnp.max(s_raw, axis=-1, keepdims=True))
    s = e * pl.reciprocal(jnp.sum(e, axis=-1, keepdims=True), approx=True)

    # Pooling: node rows of graph b only contribute to output row b (selm is
    # the mask-weighted graph one-hot), so pooling all TB graphs of the tile
    # per cluster is a single stacked matmul (contraction = TB*N).
    pooled = []
    for k in range(clusters):                    # static; clusters is tiny (1-2)
        sel = selm * s[:, k:k + 1]               # (TB*N, TB)
        pooled.append(jax.lax.dot_general(       # (TB, Cp): S_k^T @ x per graph
            sel, x, (((0,), (0,)), ((), ())),
            preferred_element_type=jnp.float32))
    p_all = pooled[0] if clusters == 1 else jnp.concatenate(pooled, axis=1)

    # Head MLP.  w1f already fuses MemPooling's lin with linear_1; w3/b3 have
    # the eval-mode BatchNorm folded in.  All widths lane-dense (exact padding).
    h = jnp.maximum(jnp.dot(p_all, w1f_ref[...],
                            preferred_element_type=jnp.float32) + b1_ref[...], 0.0)
    h = jnp.maximum(jnp.dot(h, w2_ref[...],
                            preferred_element_type=jnp.float32) + b2_ref[...], 0.0)
    h = jnp.maximum(jnp.dot(h, w3_ref[...],
                            preferred_element_type=jnp.float32) + b3_ref[...], 0.0)
    h = jnp.maximum(jnp.dot(h, w4_ref[...],
                            preferred_element_type=jnp.float32) + b4_ref[...], 0.0)
    out = jnp.dot(h, wo_ref[...], preferred_element_type=jnp.float32) + bo_ref[...]
    out_ref[...] = out.reshape(tb, 1, out.shape[-1])


# ----------------------------------------------------------------------------
# Wrapper glue
# ----------------------------------------------------------------------------
def to_dense_batch(x, batch, num_graphs, max_nodes):
    n = x.shape[0]
    counts = jnp.bincount(batch, length=num_graphs)
    starts = jnp.concatenate([jnp.zeros((1,), counts.dtype),
                              jnp.cumsum(counts)[:-1]])
    pos = jnp.arange(n, dtype=jnp.int32) - starts[batch]
    dense = jnp.zeros((num_graphs, max_nodes, x.shape[1]), x.dtype)
    dense = dense.at[batch, pos].set(x)
    mask = jnp.zeros((num_graphs, max_nodes), jnp.float32).at[batch, pos].set(1.0)
    return dense, mask


def _make_head_matrices(conv_w, heads, clusters):
    """Head-sum (HK,HK) and head-mix (HK,K) matrices for the vectorised
    per-head normalisation + Conv2d(H,1,1) mixing."""
    hk = heads * clusters
    head_id = jnp.arange(hk, dtype=jnp.int32) // clusters
    clus_id = jnp.arange(hk, dtype=jnp.int32) % clusters
    msum = (head_id[:, None] == head_id[None, :]).astype(jnp.float32)
    wmix = (clus_id[:, None] ==
            jnp.arange(clusters, dtype=jnp.int32)[None, :]).astype(jnp.float32)
    wmix = wmix * conv_w[head_id][:, None]
    return msum, wmix


def _pick_tile(num_graphs):
    # Batch several graphs per grid step, but keep >= 2 grid steps when
    # possible so the batch axis can still be sharded across v7x's 2 TCs.
    for tb in (8, 4, 2):
        if num_graphs >= 2 * tb:
            return tb
    return 1


def hetero_mempool2_forward(x_dict, batch_dict, params, num_graphs, max_nodes,
                            graphs_per_tile=None):
    """Fused MemPooling('word') + linear_1..output_layer in one pallas_call."""
    # TODO(synk): the to_dense_batch scatter stays in XLA; an in-kernel gather
    # via scalar-prefetched per-graph offsets would avoid the padded HBM trip.
    p = params
    heads, clusters, C = p['mem_k'].shape
    bsh = p['mem_lin_w'].shape[1]
    out_features = p['w_out'].shape[1]
    hid = p['w1'].shape[1]

    C_pad = _round_up(C, LANE)
    N_pad = _round_up(max_nodes, SUBLANE)
    HID_PAD = _round_up(hid, LANE)
    OUT_PAD = _round_up(out_features, LANE)
    TB = graphs_per_tile or _pick_tile(num_graphs)
    B_pad = _round_up(num_graphs, TB)
    dh = HID_PAD - hid

    # Dense batch.  Single pooling node type ('word') => torch.concat is a no-op.
    xd, mask = to_dense_batch(x_dict['word'], batch_dict['word'],
                              num_graphs, max_nodes)
    xd = jnp.pad(xd, ((0, B_pad - num_graphs), (0, N_pad - max_nodes),
                      (0, C_pad - C)))
    mask = jnp.pad(mask, ((0, B_pad - num_graphs), (0, N_pad - max_nodes)))

    # Node mask combined with within-tile graph one-hot: lets the kernel pool a
    # whole TB-graph tile with one matmul per cluster and zero out padding.
    gid = jnp.arange(B_pad, dtype=jnp.int32) % TB
    onehot = (gid[:, None] == jnp.arange(TB, dtype=jnp.int32)[None, :]
              ).astype(jnp.float32)
    sel_mask = mask[:, :, None] * onehot[:, None, :]        # (B_pad, N_pad, TB)

    # MemPooling constants (feature axis zero-padded to a multiple of 128; exact).
    kf = jnp.pad(p['mem_k'].reshape(heads * clusters, C), ((0, 0), (0, C_pad - C)))
    ksq = jnp.sum(kf * kf, axis=-1, keepdims=True).T        # (1, H*K), host-side
    msum, wmix = _make_head_matrices(p['mem_conv_w'], heads, clusters)

    # Fuse MemPooling lin (C->bsh, no bias) into linear_1, per cluster chunk (exact).
    w1f = jnp.concatenate(
        [jnp.pad(p['mem_lin_w'] @ p['w1'][k * bsh:(k + 1) * bsh, :],
                 ((0, C_pad - C), (0, dh))) for k in range(clusters)],
        axis=0)                                              # (K*Cp, HID_PAD)
    b1 = jnp.pad(p['b1'], ((0, 0), (0, dh)))

    # Fold eval-mode BatchNorm into linear_3 (exact).
    scale = p['bn_gamma'] / jnp.sqrt(p['bn_var'] + BN_EPS)   # (1, hid)
    w3f = jnp.pad(p['w3'] * scale, ((0, dh), (0, dh)))
    b3f = jnp.pad((p['b3'] - p['bn_mean']) * scale + p['bn_beta'],
                  ((0, 0), (0, dh)))

    # Remaining head-MLP parameters, zero-padded to lane-dense widths (exact).
    w2 = jnp.pad(p['w2'], ((0, dh), (0, dh)))
    w4 = jnp.pad(p['w4'], ((0, dh), (0, dh)))
    wo = jnp.pad(p['w_out'], ((0, dh), (0, OUT_PAD - out_features)))
    b2 = jnp.pad(p['b2'], ((0, 0), (0, dh)))
    b4 = jnp.pad(p['b4'], ((0, 0), (0, dh)))
    bo = jnp.pad(p['b_out'], ((0, 0), (0, OUT_PAD - out_features)))

    const_inputs = (kf, ksq, msum, wmix, w1f, b1, w2, b2, w3f, b3f,
                    w4, b4, wo, bo)
    in_specs = ([pl.BlockSpec((TB, N_pad, C_pad), lambda b: (b, 0, 0)),
                 pl.BlockSpec((TB, N_pad, TB), lambda b: (b, 0, 0))]
                + [pl.BlockSpec(a.shape, lambda b, nd=a.ndim: (0,) * nd)
                   for a in const_inputs])

    out = pl.pallas_call(
        functools.partial(_fused_kernel, clusters=clusters),
        out_shape=jax.ShapeDtypeStruct((B_pad, 1, OUT_PAD), jnp.float32),
        grid=(B_pad // TB,),
        in_specs=in_specs,
        out_specs=pl.BlockSpec((TB, 1, OUT_PAD), lambda b: (b, 0, 0)),
        compiler_params=pltpu.CompilerParams(
            dimension_semantics=("parallel",)),
    )(xd, sel_mask, *const_inputs)

    return out[:num_graphs, 0, :out_features]


# ----------------------------------------------------------------------------
# Parameters and pure-JAX reference
# ----------------------------------------------------------------------------
def init_params(key, *, in_channels, bsh, heads, clusters, out_features):
    ks = jax.random.split(key, 17)

    def nrm(k, shape, scale):
        return (scale * jax.random.normal(k, shape)).astype(jnp.float32)

    return {
        # MemPooling('word'): k (H,K,C), Conv2d(H,1,1,bias=False), Linear(C,bsh,bias=False)
        'mem_k': nrm(ks[0], (heads, clusters, in_channels), 1.0),
        'mem_conv_w': nrm(ks[1], (heads,), 1.0 / heads),
        'mem_lin_w': nrm(ks[2], (in_channels, bsh), 1.0 / math.sqrt(in_channels)),
        # linear_1: num_clusters*bsh -> 64
        'w1': nrm(ks[3], (clusters * bsh, 64), 1.0 / math.sqrt(clusters * bsh)),
        'b1': nrm(ks[4], (1, 64), 0.05),
        # linear_2: len(pooling_node_types)*64 -> 64
        'w2': nrm(ks[5], (64, 64), 1.0 / 8.0),
        'b2': nrm(ks[6], (1, 64), 0.05),
        # linear_3: 64 -> 64
        'w3': nrm(ks[7], (64, 64), 1.0 / 8.0),
        'b3': nrm(ks[8], (1, 64), 0.05),
        # batch_norm_1 (inference-mode running statistics)
        'bn_gamma': (1.0 + nrm(ks[9], (1, 64), 0.1)).astype(jnp.float32),
        'bn_beta': nrm(ks[10], (1, 64), 0.1),
        'bn_mean': nrm(ks[11], (1, 64), 0.1),
        'bn_var': (1.0 + jnp.abs(nrm(ks[12], (1, 64), 0.1))).astype(jnp.float32),
        # linear_4: 64 -> 64
        'w4': nrm(ks[13], (64, 64), 1.0 / 8.0),
        'b4': nrm(ks[14], (1, 64), 0.05),
        # output_layer: 64 -> out_features
        'w_out': nrm(ks[15], (64, out_features), 1.0 / 8.0),
        'b_out': nrm(ks[16], (1, out_features), 0.05),
    }


def reference_forward(x_dict, batch_dict, p, num_graphs, max_nodes):
    xd, mask = to_dense_batch(x_dict['word'], batch_dict['word'], num_graphs, max_nodes)
    B, N, C = xd.shape
    H, K, _ = p['mem_k'].shape
    kf = p['mem_k'].reshape(H * K, C)
    d2 = jnp.sum((xd[:, :, None, :] - kf[None, None, :, :]) ** 2, axis=-1)  # (B,N,HK)
    t = jnp.power(1.0 + d2 / TAU, -(TAU + 1.0) / 2.0).reshape(B, N, H, K)
    t = t / jnp.sum(t, axis=-1, keepdims=True)
    s = jnp.einsum('bnhk,h->bnk', t, p['mem_conv_w'])
    S = jax.nn.softmax(s, axis=-1) * mask[:, :, None]
    pooled = jnp.einsum('bnk,bnc->bkc', S, xd) @ p['mem_lin_w']
    h = pooled.reshape(B, -1)
    h = jax.nn.relu(h @ p['w1'] + p['b1'])
    h = jax.nn.relu(h @ p['w2'] + p['b2'])
    h = h @ p['w3'] + p['b3']
    h = (h - p['bn_mean']) / jnp.sqrt(p['bn_var'] + BN_EPS) * p['bn_gamma'] + p['bn_beta']
    h = jax.nn.relu(h)
    h = jax.nn.relu(h @ p['w4'] + p['b4'])
    return h @ p['w_out'] + p['b_out']


# ----------------------------------------------------------------------------
if __name__ == "__main__":
    C, HEADS, BSH, OUT_FEATURES, N_MAX = 300, 2, 256, 6, 16
    configs = [
        # (num_graphs, nodes per graph, num_clusters)
        (2, [12, 16], 1),              # module defaults (num_clusters=1)
        (5, [16, 7, 12, 16, 3], 2),    # exercises K>=2 softmax + multi-graph tiles
    ]

    key = jax.random.PRNGKey(0)
    for num_graphs, n_nodes, clusters in configs:
        key, k_params, k_x = jax.random.split(key, 3)
        params = init_params(k_params, in_channels=C, bsh=BSH, heads=HEADS,
                             clusters=clusters, out_features=OUT_FEATURES)
        x_word = jax.random.normal(k_x, (sum(n_nodes), C), jnp.float32)
        batch = jnp.concatenate([jnp.full((n,), i, jnp.int32)
                                 for i, n in enumerate(n_nodes)])
        x_dict, batch_dict = {'word': x_word}, {'word': batch}

        out = hetero_mempool2_forward(x_dict, batch_dict, params,
                                      num_graphs, N_MAX)
        out = jax.block_until_ready(out)
        ref = reference_forward(x_dict, batch_dict, params, num_graphs, N_MAX)

        assert out.shape == (num_graphs, OUT_FEATURES)
        assert bool(jnp.all(jnp.isfinite(out)))
        assert bool(jnp.allclose(out, ref, rtol=5e-2, atol=5e-2)), (
            f"mismatch (K={clusters}): max abs diff "
            f"{float(jnp.max(jnp.abs(out - ref)))}")
    print("KERNEL_OK")
</pallas_src>

<mosaic_0001>
module attributes {stable_mosaic.version = 11 : i64} {
  func.func @_fused_kernel(%arg0: i32, %arg1: memref<1x16x384xf32, #tpu.memory_space<vmem>>, %arg2: memref<1x16x1xf32, #tpu.memory_space<vmem>>, %arg3: memref<2x384xf32, #tpu.memory_space<vmem>>, %arg4: memref<1x2xf32, #tpu.memory_space<vmem>>, %arg5: memref<2x2xf32, #tpu.memory_space<vmem>>, %arg6: memref<2x1xf32, #tpu.memory_space<vmem>>, %arg7: memref<384x128xf32, #tpu.memory_space<vmem>>, %arg8: memref<1x128xf32, #tpu.memory_space<vmem>>, %arg9: memref<128x128xf32, #tpu.memory_space<vmem>>, %arg10: memref<1x128xf32, #tpu.memory_space<vmem>>, %arg11: memref<128x128xf32, #tpu.memory_space<vmem>>, %arg12: memref<1x128xf32, #tpu.memory_space<vmem>>, %arg13: memref<128x128xf32, #tpu.memory_space<vmem>>, %arg14: memref<1x128xf32, #tpu.memory_space<vmem>>, %arg15: memref<128x128xf32, #tpu.memory_space<vmem>>, %arg16: memref<1x128xf32, #tpu.memory_space<vmem>>, %arg17: memref<1x1x128xf32, #tpu.memory_space<vmem>>) attributes {dimension_semantics = [#tpu.dimension_semantics<parallel>], iteration_bounds = array<i64: 2>, scalar_prefetch = 0 : i64, scratch_operands = 0 : i64, tpu.core_type = #tpu.core_type<tc>, window_params = [{transform_indices = @transform_0, window_bounds = array<i64: 1, 16, 384>}, {transform_indices = @transform_1, window_bounds = array<i64: 1, 16, 1>}, {pipeline_mode = #tpu.pipeline_mode<synchronous>, transform_indices = @transform_2, window_bounds = array<i64: 2, 384>}, {pipeline_mode = #tpu.pipeline_mode<synchronous>, transform_indices = @transform_3, window_bounds = array<i64: 1, 2>}, {pipeline_mode = #tpu.pipeline_mode<synchronous>, transform_indices = @transform_4, window_bounds = array<i64: 2, 2>}, {pipeline_mode = #tpu.pipeline_mode<synchronous>, transform_indices = @transform_5, window_bounds = array<i64: 2, 1>}, {pipeline_mode = #tpu.pipeline_mode<synchronous>, transform_indices = @transform_6, window_bounds = array<i64: 384, 128>}, {pipeline_mode = #tpu.pipeline_mode<synchronous>, transform_indices = @transform_7, window_bounds = array<i64: 1, 128>}, {pipeline_mode = #tpu.pipeline_mode<synchronous>, transform_indices = @transform_8, window_bounds = array<i64: 128, 128>}, {pipeline_mode = #tpu.pipeline_mode<synchronous>, transform_indices = @transform_9, window_bounds = array<i64: 1, 128>}, {pipeline_mode = #tpu.pipeline_mode<synchronous>, transform_indices = @transform_10, window_bounds = array<i64: 128, 128>}, {pipeline_mode = #tpu.pipeline_mode<synchronous>, transform_indices = @transform_11, window_bounds = array<i64: 1, 128>}, {pipeline_mode = #tpu.pipeline_mode<synchronous>, transform_indices = @transform_12, window_bounds = array<i64: 128, 128>}, {pipeline_mode = #tpu.pipeline_mode<synchronous>, transform_indices = @transform_13, window_bounds = array<i64: 1, 128>}, {pipeline_mode = #tpu.pipeline_mode<synchronous>, transform_indices = @transform_14, window_bounds = array<i64: 128, 128>}, {pipeline_mode = #tpu.pipeline_mode<synchronous>, transform_indices = @transform_15, window_bounds = array<i64: 1, 128>}, {transform_indices = @transform_16, window_bounds = array<i64: 1, 1, 128>}]} {
    %c0 = arith.constant 0 : index
    %c0_0 = arith.constant 0 : index
    %c0_1 = arith.constant 0 : index
    %0 = vector.load %arg1[%c0, %c0_0, %c0_1] : memref<1x16x384xf32, #tpu.memory_space<vmem>>, vector<1x16x384xf32>
    %1 = vector.shape_cast %0 : vector<1x16x384xf32> to vector<16x384xf32>
    %c0_2 = arith.constant 0 : index
    %c0_3 = arith.constant 0 : index
    %c0_4 = arith.constant 0 : index
    %2 = vector.load %arg2[%c0_2, %c0_3, %c0_4] : memref<1x16x1xf32, #tpu.memory_space<vmem>>, vector<1x16x1xf32>
    %3 = vector.shape_cast %2 : vector<1x16x1xf32> to vector<16x1xf32>
    %c0_5 = arith.constant 0 : index
    %c0_6 = arith.constant 0 : index
    %4 = vector.load %arg3[%c0_5, %c0_6] : memref<2x384xf32, #tpu.memory_space<vmem>>, vector<2x384xf32>
    %cst = arith.constant dense<0.000000e+00> : vector<16x2xf32>
    %5 = tpu.matmul %1, %4, %cst {dimension_numbers = #tpu.dot_dimension_numbers<[1], [1], [0], [0], [0, 0, 1, 0], [], []>} : vector<16x384xf32>, vector<2x384xf32>, vector<16x2xf32> -> vector<16x2xf32>
    %6 = arith.mulf %1, %1 : vector<16x384xf32>
    %cst_7 = arith.constant dense<0.000000e+00> : vector<16xf32>
    %7 = vector.multi_reduction <add>, %6, %cst_7 [1] : vector<16x384xf32> to vector<16xf32>
    %8 = vector.shape_cast %7 : vector<16xf32> to vector<16x1xf32>
    %c0_8 = arith.constant 0 : index
    %c0_9 = arith.constant 0 : index
    %9 = vector.load %arg4[%c0_8, %c0_9] : memref<1x2xf32, #tpu.memory_space<vmem>>, vector<1x2xf32>
    %10 = vector.broadcast %8 : vector<16x1xf32> to vector<16x2xf32>
    %11 = vector.broadcast %9 : vector<1x2xf32> to vector<16x2xf32>
    %12 = arith.addf %10, %11 : vector<16x2xf32>
    %cst_10 = arith.constant 2.000000e+00 : f32
    %13 = vector.broadcast %cst_10 : f32 to vector<16x2xf32>
    %14 = arith.mulf %13, %5 : vector<16x2xf32>
    %15 = arith.subf %12, %14 : vector<16x2xf32>
    %cst_11 = arith.constant 0.000000e+00 : f32
    %16 = vector.broadcast %cst_11 : f32 to vector<16x2xf32>
    %17 = arith.maximumf %15, %16 : vector<16x2xf32>
    %cst_12 = arith.constant 1.000000e+00 : f32
    %18 = vector.broadcast %cst_12 : f32 to vector<16x2xf32>
    %19 = arith.addf %18, %17 : vector<16x2xf32>
    %20 = tpu.reciprocal %19 {approx = true} : vector<16x2xf32> -> vector<16x2xf32>
    %c0_13 = arith.constant 0 : index
    %c0_14 = arith.constant 0 : index
    %21 = vector.load %arg5[%c0_13, %c0_14] : memref<2x2xf32, #tpu.memory_space<vmem>>, vector<2x2xf32>
    %cst_15 = arith.constant dense<0.000000e+00> : vector<16x2xf32>
    %22 = tpu.matmul %20, %21, %cst_15 {dimension_numbers = #tpu.dot_dimension_numbers<[1], [0], [0], [1], [0, 0, 1, 1], [], []>} : vector<16x2xf32>, vector<2x2xf32>, vector<16x2xf32> -> vector<16x2xf32>
    %23 = tpu.reciprocal %22 {approx = true} : vector<16x2xf32> -> vector<16x2xf32>
    %24 = arith.mulf %20, %23 : vector<16x2xf32>
    %c0_16 = arith.constant 0 : index
    %c0_17 = arith.constant 0 : index
    %25 = vector.load %arg6[%c0_16, %c0_17] : memref<2x1xf32, #tpu.memory_space<vmem>>, vector<2x1xf32>
    %cst_18 = arith.constant dense<0.000000e+00> : vector<16x1xf32>
    %26 = tpu.matmul %24, %25, %cst_18 {dimension_numbers = #tpu.dot_dimension_numbers<[1], [0], [0], [1], [0, 0, 1, 1], [], []>} : vector<16x2xf32>, vector<2x1xf32>, vector<16x1xf32> -> vector<16x1xf32>
    %cst_19 = arith.constant dense<0xFF800000> : vector<16xf32>
    %27 = vector.multi_reduction <maximumf>, %26, %cst_19 [1] : vector<16x1xf32> to vector<16xf32>
    %28 = vector.shape_cast %27 : vector<16xf32> to vector<16x1xf32>
    %29 = arith.subf %26, %28 : vector<16x1xf32>
    %30 = math.exp %29 : vector<16x1xf32>
    %cst_20 = arith.constant dense<0.000000e+00> : vector<16xf32>
    %31 = vector.multi_reduction <add>, %30, %cst_20 [1] : vector<16x1xf32> to vector<16xf32>
    %32 = vector.shape_cast %31 : vector<16xf32> to vector<16x1xf32>
    %33 = tpu.reciprocal %32 {approx = true} : vector<16x1xf32> -> vector<16x1xf32>
    %34 = arith.mulf %30, %33 : vector<16x1xf32>
    %35 = arith.mulf %3, %34 : vector<16x1xf32>
    %cst_21 = arith.constant dense<0.000000e+00> : vector<1x384xf32>
    %36 = tpu.matmul %35, %1, %cst_21 {dimension_numbers = #tpu.dot_dimension_numbers<[0], [0], [1], [1], [0, 1, 1, 1], [], []>} : vector<16x1xf32>, vector<16x384xf32>, vector<1x384xf32> -> vector<1x384xf32>
    %c0_22 = arith.constant 0 : index
    %c0_23 = arith.constant 0 : index
    %37 = vector.load %arg7[%c0_22, %c0_23] : memref<384x128xf32, #tpu.memory_space<vmem>>, vector<384x128xf32>
    %cst_24 = arith.constant dense<0.000000e+00> : vector<1x128xf32>
    %38 = tpu.matmul %36, %37, %cst_24 {dimension_numbers = #tpu.dot_dimension_numbers<[1], [0], [0], [1], [0, 0, 1, 1], [], []>} : vector<1x384xf32>, vector<384x128xf32>, vector<1x128xf32> -> vector<1x128xf32>
    %c0_25 = arith.constant 0 : index
    %c0_26 = arith.constant 0 : index
    %39 = vector.load %arg8[%c0_25, %c0_26] : memref<1x128xf32, #tpu.memory_space<vmem>>, vector<1x128xf32>
    %40 = arith.addf %38, %39 : vector<1x128xf32>
    %cst_27 = arith.constant 0.000000e+00 : f32
    %41 = vector.broadcast %cst_27 : f32 to vector<1x128xf32>
    %42 = arith.maximumf %40, %41 : vector<1x128xf32>
    %c0_28 = arith.constant 0 : index
    %c0_29 = arith.constant 0 : index
    %43 = vector.load %arg9[%c0_28, %c0_29] : memref<128x128xf32, #tpu.memory_space<vmem>>, vector<128x128xf32>
    %cst_30 = arith.constant dense<0.000000e+00> : vector<1x128xf32>
    %44 = tpu.matmul %42, %43, %cst_30 {dimension_numbers = #tpu.dot_dimension_numbers<[1], [0], [0], [1], [0, 0, 1, 1], [], []>} : vector<1x128xf32>, vector<128x128xf32>, vector<1x128xf32> -> vector<1x128xf32>
    %c0_31 = arith.constant 0 : index
    %c0_32 = arith.constant 0 : index
    %45 = vector.load %arg10[%c0_31, %c0_32] : memref<1x128xf32, #tpu.memory_space<vmem>>, vector<1x128xf32>
    %46 = arith.addf %44, %45 : vector<1x128xf32>
    %cst_33 = arith.constant 0.000000e+00 : f32
    %47 = vector.broadcast %cst_33 : f32 to vector<1x128xf32>
    %48 = arith.maximumf %46, %47 : vector<1x128xf32>
    %c0_34 = arith.constant 0 : index
    %c0_35 = arith.constant 0 : index
    %49 = vector.load %arg11[%c0_34, %c0_35] : memref<128x128xf32, #tpu.memory_space<vmem>>, vector<128x128xf32>
    %cst_36 = arith.constant dense<0.000000e+00> : vector<1x128xf32>
    %50 = tpu.matmul %48, %49, %cst_36 {dimension_numbers = #tpu.dot_dimension_numbers<[1], [0], [0], [1], [0, 0, 1, 1], [], []>} : vector<1x128xf32>, vector<128x128xf32>, vector<1x128xf32> -> vector<1x128xf32>
    %c0_37 = arith.constant 0 : index
    %c0_38 = arith.constant 0 : index
    %51 = vector.load %arg12[%c0_37, %c0_38] : memref<1x128xf32, #tpu.memory_space<vmem>>, vector<1x128xf32>
    %52 = arith.addf %50, %51 : vector<1x128xf32>
    %cst_39 = arith.constant 0.000000e+00 : f32
    %53 = vector.broadcast %cst_39 : f32 to vector<1x128xf32>
    %54 = arith.maximumf %52, %53 : vector<1x128xf32>
    %c0_40 = arith.constant 0 : index
    %c0_41 = arith.constant 0 : index
    %55 = vector.load %arg13[%c0_40, %c0_41] : memref<128x128xf32, #tpu.memory_space<vmem>>, vector<128x128xf32>
    %cst_42 = arith.constant dense<0.000000e+00> : vector<1x128xf32>
    %56 = tpu.matmul %54, %55, %cst_42 {dimension_numbers = #tpu.dot_dimension_numbers<[1], [0], [0], [1], [0, 0, 1, 1], [], []>} : vector<1x128xf32>, vector<128x128xf32>, vector<1x128xf32> -> vector<1x128xf32>
    %c0_43 = arith.constant 0 : index
    %c0_44 = arith.constant 0 : index
    %57 = vector.load %arg14[%c0_43, %c0_44] : memref<1x128xf32, #tpu.memory_space<vmem>>, vector<1x128xf32>
    %58 = arith.addf %56, %57 : vector<1x128xf32>
    %cst_45 = arith.constant 0.000000e+00 : f32
    %59 = vector.broadcast %cst_45 : f32 to vector<1x128xf32>
    %60 = arith.maximumf %58, %59 : vector<1x128xf32>
    %c0_46 = arith.constant 0 : index
    %c0_47 = arith.constant 0 : index
    %61 = vector.load %arg15[%c0_46, %c0_47] : memref<128x128xf32, #tpu.memory_space<vmem>>, vector<128x128xf32>
    %cst_48 = arith.constant dense<0.000000e+00> : vector<1x128xf32>
    %62 = tpu.matmul %60, %61, %cst_48 {dimension_numbers = #tpu.dot_dimension_numbers<[1], [0], [0], [1], [0, 0, 1, 1], [], []>} : vector<1x128xf32>, vector<128x128xf32>, vector<1x128xf32> -> vector<1x128xf32>
    %c0_49 = arith.constant 0 : index
    %c0_50 = arith.constant 0 : index
    %63 = vector.load %arg16[%c0_49, %c0_50] : memref<1x128xf32, #tpu.memory_space<vmem>>, vector<1x128xf32>
    %64 = arith.addf %62, %63 : vector<1x128xf32>
    %65 = vector.shape_cast %64 : vector<1x128xf32> to vector<1x1x128xf32>
    %c0_51 = arith.constant 0 : index
    %c0_52 = arith.constant 0 : index
    %c0_53 = arith.constant 0 : index
    %66 = vector.load %arg17[%c0_51, %c0_52, %c0_53] : memref<1x1x128xf32, #tpu.memory_space<vmem>>, vector<1x1x128xf32>
    tpu.vector_store %arg17[%c0_51, %c0_52, %c0_53], %65 {strides = array<i32>} : memref<1x1x128xf32, #tpu.memory_space<vmem>>, vector<1x1x128xf32>,
    return
  }
  func.func @transform_0(%arg0: i32) -> (i32, i32, i32) {
    %c0_i32 = arith.constant 0 : i32
    %c0_i32_0 = arith.constant 0 : i32
    %c0_i32_1 = arith.constant 0 : i32
    return %arg0, %c0_i32, %c0_i32_0 : i32, i32, i32
  }
  func.func @transform_1(%arg0: i32) -> (i32, i32, i32) {
    %c0_i32 = arith.constant 0 : i32
    %c0_i32_0 = arith.constant 0 : i32
    %c0_i32_1 = arith.constant 0 : i32
    return %arg0, %c0_i32, %c0_i32_0 : i32, i32, i32
  }
  func.func @transform_2(%arg0: i32) -> (i32, i32) {
    %c0_i32 = arith.constant 0 : i32
    %c0_i32_0 = arith.constant 0 : i32
    %c0_i32_1 = arith.constant 0 : i32
    return %c0_i32, %c0_i32_0 : i32, i32
  }
  func.func @transform_3(%arg0: i32) -> (i32, i32) {
    %c0_i32 = arith.constant 0 : i32
    %c0_i32_0 = arith.constant 0 : i32
    %c0_i32_1 = arith.constant 0 : i32
    return %c0_i32, %c0_i32_0 : i32, i32
  }
  func.func @transform_4(%arg0: i32) -> (i32, i32) {
    %c0_i32 = arith.constant 0 : i32
    %c0_i32_0 = arith.constant 0 : i32
    %c0_i32_1 = arith.constant 0 : i32
    return %c0_i32, %c0_i32_0 : i32, i32
  }
  func.func @transform_5(%arg0: i32) -> (i32, i32) {
    %c0_i32 = arith.constant 0 : i32
    %c0_i32_0 = arith.constant 0 : i32
    %c0_i32_1 = arith.constant 0 : i32
    return %c0_i32, %c0_i32_0 : i32, i32
  }
  func.func @transform_6(%arg0: i32) -> (i32, i32) {
    %c0_i32 = arith.constant 0 : i32
    %c0_i32_0 = arith.constant 0 : i32
    %c0_i32_1 = arith.constant 0 : i32
    return %c0_i32, %c0_i32_0 : i32, i32
  }
  func.func @transform_7(%arg0: i32) -> (i32, i32) {
    %c0_i32 = arith.constant 0 : i32
    %c0_i32_0 = arith.constant 0 : i32
    %c0_i32_1 = arith.constant 0 : i32
    return %c0_i32, %c0_i32_0 : i32, i32
  }
  func.func @transform_8(%arg0: i32) -> (i32, i32) {
    %c0_i32 = arith.constant 0 : i32
    %c0_i32_0 = arith.constant 0 : i32
    %c0_i32_1 = arith.constant 0 : i32
    return %c0_i32, %c0_i32_0 : i32, i32
  }
  func.func @transform_9(%arg0: i32) -> (i32, i32) {
    %c0_i32 = arith.constant 0 : i32
    %c0_i32_0 = arith.constant 0 : i32
    %c0_i32_1 = arith.constant 0 : i32
    return %c0_i32, %c0_i32_0 : i32, i32
  }
  func.func @transform_10(%arg0: i32) -> (i32, i32) {
    %c0_i32 = arith.constant 0 : i32
    %c0_i32_0 = arith.constant 0 : i32
    %c0_i32_1 = arith.constant 0 : i32
    return %c0_i32, %c0_i32_0 : i32, i32
  }
  func.func @transform_11(%arg0: i32) -> (i32, i32) {
    %c0_i32 = arith.constant 0 : i32
    %c0_i32_0 = arith.constant 0 : i32
    %c0_i32_1 = arith.constant 0 : i32
    return %c0_i32, %c0_i32_0 : i32, i32
  }
  func.func @transform_12(%arg0: i32) -> (i32, i32) {
    %c0_i32 = arith.constant 0 : i32
    %c0_i32_0 = arith.constant 0 : i32
    %c0_i32_1 = arith.constant 0 : i32
    return %c0_i32, %c0_i32_0 : i32, i32
  }
  func.func @transform_13(%arg0: i32) -> (i32, i32) {
    %c0_i32 = arith.constant 0 : i32
    %c0_i32_0 = arith.constant 0 : i32
    %c0_i32_1 = arith.constant 0 : i32
    return %c0_i32, %c0_i32_0 : i32, i32
  }
  func.func @transform_14(%arg0: i32) -> (i32, i32) {
    %c0_i32 = arith.constant 0 : i32
    %c0_i32_0 = arith.constant 0 : i32
    %c0_i32_1 = arith.constant 0 : i32
    return %c0_i32, %c0_i32_0 : i32, i32
  }
  func.func @transform_15(%arg0: i32) -> (i32, i32) {
    %c0_i32 = arith.constant 0 : i32
    %c0_i32_0 = arith.constant 0 : i32
    %c0_i32_1 = arith.constant 0 : i32
    return %c0_i32, %c0_i32_0 : i32, i32
  }
  func.func @transform_16(%arg0: i32) -> (i32, i32, i32) {
    %c0_i32 = arith.constant 0 : i32
    %c0_i32_0 = arith.constant 0 : i32
    %c0_i32_1 = arith.constant 0 : i32
    return %arg0, %c0_i32, %c0_i32_0 : i32, i32, i32
  }
}

</mosaic_0001>

<llo_original>
// kernel: tpu_custom_call.1
$region0: #{tpu_custom_call.1}
  #allocation0 [shape = 'u32[]', space=smem, size = 0x4, offset = 0x4, fixed_abs, tag = 'smem constant byte address 0x4 - core index']
  #allocation1 [shape = 'u32[144,128]{1,0:T(1,128)}', space=vmem, size = 0x12000, scoped, tag = 'internal scratch']
  %s0 = inlined_call_operand.hbm [shape: f32[2,16,384], index: 0, kind: input, shape index: {}]
  %s1 = inlined_call_operand.vmem [shape: f32[2,16,1], index: 1, kind: input, shape index: {}]
  %s2 = inlined_call_operand.vmem [shape: f32[2,384], index: 2, kind: input, shape index: {}]
  %s3 = inlined_call_operand.vmem [shape: f32[1,2], index: 3, kind: input, shape index: {}]
  %s4 = inlined_call_operand.vmem [shape: f32[2,2], index: 4, kind: input, shape index: {}]
  %s5 = inlined_call_operand.vmem [shape: f32[2,1], index: 5, kind: input, shape index: {}]
  %s6 = inlined_call_operand.hbm [shape: f32[384,128], index: 6, kind: input, shape index: {}]
  %s7 = inlined_call_operand.vmem [shape: f32[1,128], index: 7, kind: input, shape index: {}]
  %s8 = inlined_call_operand.hbm [shape: f32[128,128], index: 8, kind: input, shape index: {}]
  %s9 = inlined_call_operand.vmem [shape: f32[1,128], index: 9, kind: input, shape index: {}]
  %s10 = inlined_call_operand.hbm [shape: f32[128,128], index: 10, kind: input, shape index: {}]
  %s11 = inlined_call_operand.vmem [shape: f32[1,128], index: 11, kind: input, shape index: {}]
  %s12 = inlined_call_operand.hbm [shape: f32[128,128], index: 12, kind: input, shape index: {}]
  %s13 = inlined_call_operand.vmem [shape: f32[1,128], index: 13, kind: input, shape index: {}]
  %s14 = inlined_call_operand.hbm [shape: f32[128,128], index: 14, kind: input, shape index: {}]
  %s15 = inlined_call_operand.vmem [shape: f32[1,128], index: 15, kind: input, shape index: {}]
  %s16 = inlined_call_operand.hbm [shape: f32[2,1,128], index: 16, kind: output, shape index: {}]
  %s17 = sld [smem:[#allocation0]]
  $region121: #{tpu_custom_call.1} parent=0
    _
  %s19 = ssub.s32 1, %s17
  %s20 = scalar_select 0, %s19, %s17
  $region1: #{tpu_custom_call.1} parent=0
    #allocation2 [shape = 'u8[49152]{0}', space=vmem, size = 0xc000, scoped, tag = 'input window, operand 0']
    #allocation3 [shape = 's32[2]{0}', space=sflag, size = 0x8, scoped, tag = 'scoped memory for tpu_custom_call.1']
    #allocation4 [shape = 's32[2]{0}', space=sflag, size = 0x8, scoped, tag = 'scoped memory for tpu_custom_call.1']
    #allocation5 [shape = 'u8[196608]{0}', space=vmem, size = 0x30000, scoped, tag = 'input window, operand 6, single buffered']
    #allocation6 [shape = 's32[1]{0}', space=sflag, size = 0x4, scoped, tag = 'scoped memory for tpu_custom_call.1']
    #allocation7 [shape = 'u8[65536]{0}', space=vmem, size = 0x10000, scoped, tag = 'input window, operand 8, single buffered']
    #allocation8 [shape = 'u8[65536]{0}', space=vmem, size = 0x10000, scoped, tag = 'input window, operand 10, single buffered']
    #allocation9 [shape = 's32[1]{0}', space=sflag, size = 0x4, scoped, tag = 'scoped memory for tpu_custom_call.1']
    #allocation10 [shape = 'u8[65536]{0}', space=vmem, size = 0x10000, scoped, tag = 'input window, operand 12, single buffered']
    #allocation11 [shape = 'u8[65536]{0}', space=vmem, size = 0x10000, scoped, tag = 'input window, operand 14, single buffered']
    #allocation12 [shape = 's32[1]{0}', space=sflag, size = 0x4, scoped, tag = 'scoped memory for tpu_custom_call.1']
    #allocation13 [shape = 'u8[1024]{0}', space=vmem, size = 0x400, scoped, tag = 'output window, operand 0']
    %21 = vsyncpa [#allocation3], 0
    %s22 = scalar_lea.sflag [#allocation3], 1
    %23 = vsyncpa %s22, 0
    %24 = vsyncpa [#allocation6], 0
    %25 = vsyncpa [#allocation9], 0
    %26 = vsyncpa [#allocation12], 0
    %27 = vsyncpa [#allocation4], 0
    %s28 = scalar_lea.sflag [#allocation4], 1
    %29 = vsyncpa %s28, 0
    loop: start=0, step=1, limit=4
    $region2: #{tpu_custom_call.1} parent=1 // loop_pre_header
      _
    $region3: #{tpu_custom_call.1} parent=1 // loop_header
      %s31 = sphi 0, %s35
      %p32 = scmp.ge.s32.totalorder %s31, 4
      %s41 = sphi 0, %s43
      %s44 = sphi 0, %s41
      %s45 = sphi 0, %s44
      %s61 = sphi 0, %s45
      %s67 = sphi 0, %s69
      %s70 = sphi 0, %s67
      %s71 = sphi 0, %s70
      %s87 = sphi 0, %s71
      %s91 = sphi 0, %s91
      %s93 = sphi 0, %s91
      %s94 = sphi 0, %s93
      %s108 = sphi 0, %s94
      %s112 = sphi 0, %s112
      %s114 = sphi 0, %s112
      %s115 = sphi 0, %s114
      %s129 = sphi 0, %s115
      %s133 = sphi 0, %s133
      %s135 = sphi 0, %s133
      %s136 = sphi 0, %s135
      %s150 = sphi 0, %s136
      %s154 = sphi 0, %s154
      %s156 = sphi 0, %s154
      %s157 = sphi 0, %s156
      %s171 = sphi 0, %s157
      %s175 = sphi 0, %s175
      %s177 = sphi 0, %s175
      %s178 = sphi 0, %s177
      %s192 = sphi 0, %s178
      %s196 = sphi 0, %s196
      %s198 = sphi 0, %s196
      %s199 = sphi 0, %s198
      %s213 = sphi 0, %s199
      %s217 = sphi 0, %s217
      %s219 = sphi 0, %s217
      %s220 = sphi 0, %s219
      %s234 = sphi 0, %s220
      %s238 = sphi 0, %s238
      %s240 = sphi 0, %s238
      %s241 = sphi 0, %s240
      %s255 = sphi 0, %s241
      %s259 = sphi 0, %s259
      %s261 = sphi 0, %s259
      %s262 = sphi 0, %s261
      %s276 = sphi 0, %s262
      %s280 = sphi 0, %s280
      %s282 = sphi 0, %s280
      %s283 = sphi 0, %s282
      %s297 = sphi 0, %s283
      %s301 = sphi 0, %s301
      %s303 = sphi 0, %s301
      %s304 = sphi 0, %s303
      %s318 = sphi 0, %s304
      %s322 = sphi 0, %s322
      %s324 = sphi 0, %s322
      %s325 = sphi 0, %s324
      %s339 = sphi 0, %s325
      %s343 = sphi 0, %s343
      %s345 = sphi 0, %s343
      %s346 = sphi 0, %s345
      %s360 = sphi 0, %s346
      %s364 = sphi 0, %s364
      %s366 = sphi 0, %s364
      %s367 = sphi 0, %s366
      %s381 = sphi 0, %s367
      %s387 = sphi 0, %s389
      %s390 = sphi 0, %s387
      %s391 = sphi 0, %s390
      %s407 = sphi 0, %s391
    $region4: #{tpu_custom_call.1} parent=1 // loop_header_branch
      %34 = sbr.rel (%p32) target = $region8
    $region5: #{tpu_custom_call.1} parent=1 // loop_body
      %s36 = ssub.s32 %s31, 1
      %s37 = ssub.s32 %s31, 2
      %s38 = sadd.s32 %s31, 1
      %s39 = ssub.s32 %s31, %s38
      %p40 = scmp.eq.s32.totalorder %s39, 0
      %s42 = sadd.s32 %s41, 1
      %s43 = scalar_select %p40, %s41, %s42
      %p46 = pneg %p40
      %p47 = scmp.eq.s32.totalorder %s31, 1
      %p48 = por %p46, %p47
      %p49 = scmp.ne.s32.totalorder %s41, %s44
      %p50 = scmp.eq.s32.totalorder %s31, 0
      %p51 = por %p49, %p50
      %p52 = scmp.ne.s32.totalorder %s41, %s44
      %p53 = scmp.eq.s32.totalorder %s36, 1
      %p54 = por %p52, %p53
      %p55 = scmp.ne.s32.totalorder %s44, %s45
      %p56 = scmp.eq.s32.totalorder %s36, 0
      %p57 = por %p55, %p56
      %p58 = scmp.ne.s32.totalorder %s44, %s45
      %p59 = scmp.eq.s32.totalorder %s37, 1
      %p60 = por %p58, %p59
      %p62 = scmp.ne.s32.totalorder %s45, %s61
      %p63 = scmp.eq.s32.totalorder %s37, 0
      %p64 = por %p62, %p63
      %s65 = ssub.s32 %s31, %s38
      %p66 = scmp.eq.s32.totalorder %s65, 0
      %s68 = sadd.s32 %s67, 1
      %s69 = scalar_select %p66, %s67, %s68
      %p72 = pneg %p66
      %p73 = scmp.eq.s32.totalorder %s31, 1
      %p74 = por %p72, %p73
      %p75 = scmp.ne.s32.totalorder %s67, %s70
      %p76 = scmp.eq.s32.totalorder %s31, 0
      %p77 = por %p75, %p76
      %p78 = scmp.ne.s32.totalorder %s67, %s70
      %p79 = scmp.eq.s32.totalorder %s36, 1
      %p80 = por %p78, %p79
      %p81 = scmp.ne.s32.totalorder %s70, %s71
      %p82 = scmp.eq.s32.totalorder %s36, 0
      %p83 = por %p81, %p82
      %p84 = scmp.ne.s32.totalorder %s70, %s71
      %p85 = scmp.eq.s32.totalorder %s37, 1
      %p86 = por %p84, %p85
      %p88 = scmp.ne.s32.totalorder %s71, %s87
      %p89 = scmp.eq.s32.totalorder %s37, 0
      %p90 = por %p88, %p89
      %s92 = sadd.s32 %s91, 1
      %p95 = scmp.eq.s32.totalorder %s31, 1
      %p96 = scmp.ne.s32.totalorder %s91, %s93
      %p97 = scmp.eq.s32.totalorder %s31, 0
      %p98 = por %p96, %p97
      %p99 = scmp.ne.s32.totalorder %s91, %s93
      %p100 = scmp.eq.s32.totalorder %s36, 1
      %p101 = por %p99, %p100
      %p102 = scmp.ne.s32.totalorder %s93, %s94
      %p103 = scmp.eq.s32.totalorder %s36, 0
      %p104 = por %p102, %p103
      %p105 = scmp.ne.s32.totalorder %s93, %s94
      %p106 = scmp.eq.s32.totalorder %s37, 1
      %p107 = por %p105, %p106
      %p109 = scmp.ne.s32.totalorder %s94, %s108
      %p110 = scmp.eq.s32.totalorder %s37, 0
      %p111 = por %p109, %p110
      %s113 = sadd.s32 %s112, 1
      %p116 = scmp.eq.s32.totalorder %s31, 1
      %p117 = scmp.ne.s32.totalorder %s112, %s114
      %p118 = scmp.eq.s32.totalorder %s31, 0
      %p119 = por %p117, %p118
      %p120 = scmp.ne.s32.totalorder %s112, %s114
      %p121 = scmp.eq.s32.totalorder %s36, 1
      %p122 = por %p120, %p121
      %p123 = scmp.ne.s32.totalorder %s114, %s115
      %p124 = scmp.eq.s32.totalorder %s36, 0
      %p125 = por %p123, %p124
      %p126 = scmp.ne.s32.totalorder %s114, %s115
      %p127 = scmp.eq.s32.totalorder %s37, 1
      %p128 = por %p126, %p127
      %p130 = scmp.ne.s32.totalorder %s115, %s129
      %p131 = scmp.eq.s32.totalorder %s37, 0
      %p132 = por %p130, %p131
      %s134 = sadd.s32 %s133, 1
      %p137 = scmp.eq.s32.totalorder %s31, 1
      %p138 = scmp.ne.s32.totalorder %s133, %s135
      %p139 = scmp.eq.s32.totalorder %s31, 0
      %p140 = por %p138, %p139
      %p141 = scmp.ne.s32.totalorder %s133, %s135
      %p142 = scmp.eq.s32.totalorder %s36, 1
      %p143 = por %p141, %p142
      %p144 = scmp.ne.s32.totalorder %s135, %s136
      %p145 = scmp.eq.s32.totalorder %s36, 0
      %p146 = por %p144, %p145
      %p147 = scmp.ne.s32.totalorder %s135, %s136
      %p148 = scmp.eq.s32.totalorder %s37, 1
      %p149 = por %p147, %p148
      %p151 = scmp.ne.s32.totalorder %s136, %s150
      %p152 = scmp.eq.s32.totalorder %s37, 0
      %p153 = por %p151, %p152
      %s155 = sadd.s32 %s154, 1
      %p158 = scmp.eq.s32.totalorder %s31, 1
      %p159 = scmp.ne.s32.totalorder %s154, %s156
      %p160 = scmp.eq.s32.totalorder %s31, 0
      %p161 = por %p159, %p160
      %p162 = scmp.ne.s32.totalorder %s154, %s156
      %p163 = scmp.eq.s32.totalorder %s36, 1
      %p164 = por %p162, %p163
      %p165 = scmp.ne.s32.totalorder %s156, %s157
      %p166 = scmp.eq.s32.totalorder %s36, 0
      %p167 = por %p165, %p166
      %p168 = scmp.ne.s32.totalorder %s156, %s157
      %p169 = scmp.eq.s32.totalorder %s37, 1
      %p170 = por %p168, %p169
      %p172 = scmp.ne.s32.totalorder %s157, %s171
      %p173 = scmp.eq.s32.totalorder %s37, 0
      %p174 = por %p172, %p173
      %s176 = sadd.s32 %s175, 1
      %p179 = scmp.eq.s32.totalorder %s31, 1
      %p180 = scmp.ne.s32.totalorder %s175, %s177
      %p181 = scmp.eq.s32.totalorder %s31, 0
      %p182 = por %p180, %p181
      %p183 = scmp.ne.s32.totalorder %s175, %s177
      %p184 = scmp.eq.s32.totalorder %s36, 1
      %p185 = por %p183, %p184
      %p186 = scmp.ne.s32.totalorder %s177, %s178
      %p187 = scmp.eq.s32.totalorder %s36, 0
      %p188 = por %p186, %p187
      %p189 = scmp.ne.s32.totalorder %s177, %s178
      %p190 = scmp.eq.s32.totalorder %s37, 1
      %p191 = por %p189, %p190
      %p193 = scmp.ne.s32.totalorder %s178, %s192
      %p194 = scmp.eq.s32.totalorder %s37, 0
      %p195 = por %p193, %p194
      %s197 = sadd.s32 %s196, 1
      %p200 = scmp.eq.s32.totalorder %s31, 1
      %p201 = scmp.ne.s32.totalorder %s196, %s198
      %p202 = scmp.eq.s32.totalorder %s31, 0
      %p203 = por %p201, %p202
      %p204 = scmp.ne.s32.totalorder %s196, %s198
      %p205 = scmp.eq.s32.totalorder %s36, 1
      %p206 = por %p204, %p205
      %p207 = scmp.ne.s32.totalorder %s198, %s199
      %p208 = scmp.eq.s32.totalorder %s36, 0
      %p209 = por %p207, %p208
      %p210 = scmp.ne.s32.totalorder %s198, %s199
      %p211 = scmp.eq.s32.totalorder %s37, 1
      %p212 = por %p210, %p211
      %p214 = scmp.ne.s32.totalorder %s199, %s213
      %p215 = scmp.eq.s32.totalorder %s37, 0
      %p216 = por %p214, %p215
      %s218 = sadd.s32 %s217, 1
      %p221 = scmp.eq.s32.totalorder %s31, 1
      %p222 = scmp.ne.s32.totalorder %s217, %s219
      %p223 = scmp.eq.s32.totalorder %s31, 0
      %p224 = por %p222, %p223
      %p225 = scmp.ne.s32.totalorder %s217, %s219
      %p226 = scmp.eq.s32.totalorder %s36, 1
      %p227 = por %p225, %p226
      %p228 = scmp.ne.s32.totalorder %s219, %s220
      %p229 = scmp.eq.s32.totalorder %s36, 0
      %p230 = por %p228, %p229
      %p231 = scmp.ne.s32.totalorder %s219, %s220
      %p232 = scmp.eq.s32.totalorder %s37, 1
      %p233 = por %p231, %p232
      %p235 = scmp.ne.s32.totalorder %s220, %s234
      %p236 = scmp.eq.s32.totalorder %s37, 0
      %p237 = por %p235, %p236
      %s239 = sadd.s32 %s238, 1
      %p242 = scmp.eq.s32.totalorder %s31, 1
      %p243 = scmp.ne.s32.totalorder %s238, %s240
      %p244 = scmp.eq.s32.totalorder %s31, 0
      %p245 = por %p243, %p244
      %p246 = scmp.ne.s32.totalorder %s238, %s240
      %p247 = scmp.eq.s32.totalorder %s36, 1
      %p248 = por %p246, %p247
      %p249 = scmp.ne.s32.totalorder %s240, %s241
      %p250 = scmp.eq.s32.totalorder %s36, 0
      %p251 = por %p249, %p250
      %p252 = scmp.ne.s32.totalorder %s240, %s241
      %p253 = scmp.eq.s32.totalorder %s37, 1
      %p254 = por %p252, %p253
      %p256 = scmp.ne.s32.totalorder %s241, %s255
      %p257 = scmp.eq.s32.totalorder %s37, 0
      %p258 = por %p256, %p257
      %s260 = sadd.s32 %s259, 1
      %p263 = scmp.eq.s32.totalorder %s31, 1
      %p264 = scmp.ne.s32.totalorder %s259, %s261
      %p265 = scmp.eq.s32.totalorder %s31, 0
      %p266 = por %p264, %p265
      %p267 = scmp.ne.s32.totalorder %s259, %s261
      %p268 = scmp.eq.s32.totalorder %s36, 1
      %p269 = por %p267, %p268
      %p270 = scmp.ne.s32.totalorder %s261, %s262
      %p271 = scmp.eq.s32.totalorder %s36, 0
      %p272 = por %p270, %p271
      %p273 = scmp.ne.s32.totalorder %s261, %s262
      %p274 = scmp.eq.s32.totalorder %s37, 1
      %p275 = por %p273, %p274
      %p277 = scmp.ne.s32.totalorder %s262, %s276
      %p278 = scmp.eq.s32.totalorder %s37, 0
      %p279 = por %p277, %p278
      %s281 = sadd.s32 %s280, 1
      %p284 = scmp.eq.s32.totalorder %s31, 1
      %p285 = scmp.ne.s32.totalorder %s280, %s282
      %p286 = scmp.eq.s32.totalorder %s31, 0
      %p287 = por %p285, %p286
      %p288 = scmp.ne.s32.totalorder %s280, %s282
      %p289 = scmp.eq.s32.totalorder %s36, 1
      %p290 = por %p288, %p289
      %p291 = scmp.ne.s32.totalorder %s282, %s283
      %p292 = scmp.eq.s32.totalorder %s36, 0
      %p293 = por %p291, %p292
      %p294 = scmp.ne.s32.totalorder %s282, %s283
      %p295 = scmp.eq.s32.totalorder %s37, 1
      %p296 = por %p294, %p295
      %p298 = scmp.ne.s32.totalorder %s283, %s297
      %p299 = scmp.eq.s32.totalorder %s37, 0
      %p300 = por %p298, %p299
      %s302 = sadd.s32 %s301, 1
      %p305 = scmp.eq.s32.totalorder %s31, 1
      %p306 = scmp.ne.s32.totalorder %s301, %s303
      %p307 = scmp.eq.s32.totalorder %s31, 0
      %p308 = por %p306, %p307
      %p309 = scmp.ne.s32.totalorder %s301, %s303
      %p310 = scmp.eq.s32.totalorder %s36, 1
      %p311 = por %p309, %p310
      %p312 = scmp.ne.s32.totalorder %s303, %s304
      %p313 = scmp.eq.s32.totalorder %s36, 0
      %p314 = por %p312, %p313
      %p315 = scmp.ne.s32.totalorder %s303, %s304
      %p316 = scmp.eq.s32.totalorder %s37, 1
      %p317 = por %p315, %p316
      %p319 = scmp.ne.s32.totalorder %s304, %s318
      %p320 = scmp.eq.s32.totalorder %s37, 0
      %p321 = por %p319, %p320
      %s323 = sadd.s32 %s322, 1
      %p326 = scmp.eq.s32.totalorder %s31, 1
      %p327 = scmp.ne.s32.totalorder %s322, %s324
      %p328 = scmp.eq.s32.totalorder %s31, 0
      %p329 = por %p327, %p328
      %p330 = scmp.ne.s32.totalorder %s322, %s324
      %p331 = scmp.eq.s32.totalorder %s36, 1
      %p332 = por %p330, %p331
      %p333 = scmp.ne.s32.totalorder %s324, %s325
      %p334 = scmp.eq.s32.totalorder %s36, 0
      %p335 = por %p333, %p334
      %p336 = scmp.ne.s32.totalorder %s324, %s325
      %p337 = scmp.eq.s32.totalorder %s37, 1
      %p338 = por %p336, %p337
      %p340 = scmp.ne.s32.totalorder %s325, %s339
      %p341 = scmp.eq.s32.totalorder %s37, 0
      %p342 = por %p340, %p341
      %s344 = sadd.s32 %s343, 1
      %p347 = scmp.eq.s32.totalorder %s31, 1
      %p348 = scmp.ne.s32.totalorder %s343, %s345
      %p349 = scmp.eq.s32.totalorder %s31, 0
      %p350 = por %p348, %p349
      %p351 = scmp.ne.s32.totalorder %s343, %s345
      %p352 = scmp.eq.s32.totalorder %s36, 1
      %p353 = por %p351, %p352
      %p354 = scmp.ne.s32.totalorder %s345, %s346
      %p355 = scmp.eq.s32.totalorder %s36, 0
      %p356 = por %p354, %p355
      %p357 = scmp.ne.s32.totalorder %s345, %s346
      %p358 = scmp.eq.s32.totalorder %s37, 1
      %p359 = por %p357, %p358
      %p361 = scmp.ne.s32.totalorder %s346, %s360
      %p362 = scmp.eq.s32.totalorder %s37, 0
      %p363 = por %p361, %p362
      %s365 = sadd.s32 %s364, 1
      %p368 = scmp.eq.s32.totalorder %s31, 1
      %p369 = scmp.ne.s32.totalorder %s364, %s366
      %p370 = scmp.eq.s32.totalorder %s31, 0
      %p371 = por %p369, %p370
      %p372 = scmp.ne.s32.totalorder %s364, %s366
      %p373 = scmp.eq.s32.totalorder %s36, 1
      %p374 = por %p372, %p373
      %p375 = scmp.ne.s32.totalorder %s366, %s367
      %p376 = scmp.eq.s32.totalorder %s36, 0
      %p377 = por %p375, %p376
      %p378 = scmp.ne.s32.totalorder %s366, %s367
      %p379 = scmp.eq.s32.totalorder %s37, 1
      %p380 = por %p378, %p379
      %p382 = scmp.ne.s32.totalorder %s367, %s381
      %p383 = scmp.eq.s32.totalorder %s37, 0
      %p384 = por %p382, %p383
      %s385 = ssub.s32 %s31, %s38
      %p386 = scmp.eq.s32.totalorder %s385, 0
      %s388 = sadd.s32 %s387, 1
      %s389 = scalar_select %p386, %s387, %s388
      %p392 = pneg %p386
      %p393 = scmp.eq.s32.totalorder %s31, 1
      %p394 = por %p392, %p393
      %p395 = scmp.ne.s32.totalorder %s387, %s390
      %p396 = scmp.eq.s32.totalorder %s31, 0
      %p397 = por %p395, %p396
      %p398 = scmp.ne.s32.totalorder %s387, %s390
      %p399 = scmp.eq.s32.totalorder %s36, 1
      %p400 = por %p398, %p399
      %p401 = scmp.ne.s32.totalorder %s390, %s391
      %p402 = scmp.eq.s32.totalorder %s36, 0
      %p403 = por %p401, %p402
      %p404 = scmp.ne.s32.totalorder %s390, %s391
      %p405 = scmp.eq.s32.totalorder %s37, 1
      %p406 = por %p404, %p405
      %p408 = scmp.ne.s32.totalorder %s391, %s407
      %p409 = scmp.eq.s32.totalorder %s37, 0
      %p410 = por %p408, %p409
      %p411 = scmp.le.s32.totalorder 1, %s31
      %p412 = scmp.lt.s32.totalorder %s31, 3
      %p413 = pnand %p411, %p412
      %p414 = pneg %p413
      // Predicated region
      $region9: #{tpu_custom_call.1} parent=5 // pred_check
        _
      $region10: #{tpu_custom_call.1} parent=5 // pred_check_branch
        %416 = sbr.rel (%p413) target = $region12
      $region11: #{tpu_custom_call.1} parent=5 // pred_region
        %s417 = ssub.s32 %s31, 1
        // Predicated region
        $region13: #{tpu_custom_call.1} parent=11 // pred_check
          %p418 = pneg %p104
        $region14: #{tpu_custom_call.1} parent=11 // pred_check_branch
          %420 = sbr.rel (%p418) target = $region16
        $region15: #{tpu_custom_call.1} parent=11 // pred_region
          _
        $region16: #{tpu_custom_call.1} parent=11 // pred_fallthru
          _
        // Predicated region
        $region17: #{tpu_custom_call.1} parent=11 // pred_check
          %p421 = pneg %p125
        $region18: #{tpu_custom_call.1} parent=11 // pred_check_branch
          %423 = sbr.rel (%p421) target = $region20
        $region19: #{tpu_custom_call.1} parent=11 // pred_region
          _
        $region20: #{tpu_custom_call.1} parent=11 // pred_fallthru
          _
        // Predicated region
        $region21: #{tpu_custom_call.1} parent=11 // pred_check
          %p424 = pneg %p146
        $region22: #{tpu_custom_call.1} parent=11 // pred_check_branch
          %426 = sbr.rel (%p424) target = $region24
        $region23: #{tpu_custom_call.1} parent=11 // pred_region
          _
        $region24: #{tpu_custom_call.1} parent=11 // pred_fallthru
          _
        // Predicated region
        $region25: #{tpu_custom_call.1} parent=11 // pred_check
          %p427 = pneg %p167
        $region26: #{tpu_custom_call.1} parent=11 // pred_check_branch
          %429 = sbr.rel (%p427) target = $region28
        $region27: #{tpu_custom_call.1} parent=11 // pred_region
          _
        $region28: #{tpu_custom_call.1} parent=11 // pred_fallthru
          _
        // Predicated region
        $region29: #{tpu_custom_call.1} parent=11 // pred_check
          %p430 = pneg %p188
        $region30: #{tpu_custom_call.1} parent=11 // pred_check_branch
          %432 = sbr.rel (%p430) target = $region32
        $region31: #{tpu_custom_call.1} parent=11 // pred_region
          %s434 = ssub.s32 6144, 6144
          %435 = vsyncadd [#allocation6], %s434
          %s436 = sshll.u32 [#allocation5], 4
          %s437 = int_to_ptr.vmem [resolvable:$true] %s436
          %442 = dma.hbm_to_vmem [thread:$0]  %s6, 6144, %s437, [#allocation6], 128, 128, 8
        $region32: #{tpu_custom_call.1} parent=11 // pred_fallthru
          _
        // Predicated region
        $region33: #{tpu_custom_call.1} parent=11 // pred_check
          %p443 = pneg %p209
        $region34: #{tpu_custom_call.1} parent=11 // pred_check_branch
          %445 = sbr.rel (%p443) target = $region36
        $region35: #{tpu_custom_call.1} parent=11 // pred_region
          _
        $region36: #{tpu_custom_call.1} parent=11 // pred_fallthru
          _
        // Predicated region
        $region37: #{tpu_custom_call.1} parent=11 // pred_check
          %p446 = pneg %p230
        $region38: #{tpu_custom_call.1} parent=11 // pred_check_branch
          %448 = sbr.rel (%p446) target = $region40
        $region39: #{tpu_custom_call.1} parent=11 // pred_region
          %s450 = ssub.s32 2048, 2048
          %451 = vsyncadd [#allocation6], %s450
          %s452 = sshll.u32 [#allocation7], 4
          %s453 = int_to_ptr.vmem [resolvable:$true] %s452
          %458 = dma.hbm_to_vmem [thread:$0]  %s8, 2048, %s453, [#allocation6], 128, 128, 8
        $region40: #{tpu_custom_call.1} parent=11 // pred_fallthru
          _
        // Predicated region
        $region41: #{tpu_custom_call.1} parent=11 // pred_check
          %p459 = pneg %p251
        $region42: #{tpu_custom_call.1} parent=11 // pred_check_branch
          %461 = sbr.rel (%p459) target = $region44
        $region43: #{tpu_custom_call.1} parent=11 // pred_region
          _
        $region44: #{tpu_custom_call.1} parent=11 // pred_fallthru
          _
        // Predicated region
        $region45: #{tpu_custom_call.1} parent=11 // pred_check
          %p462 = pneg %p272
        $region46: #{tpu_custom_call.1} parent=11 // pred_check_branch
          %464 = sbr.rel (%p462) target = $region48
        $region47: #{tpu_custom_call.1} parent=11 // pred_region
          %s466 = ssub.s32 2048, 2048
          %467 = vsyncadd [#allocation9], %s466
          %s468 = sshll.u32 [#allocation8], 4
          %s469 = int_to_ptr.vmem [resolvable:$true] %s468
          %474 = dma.hbm_to_vmem [thread:$0]  %s10, 2048, %s469, [#allocation9], 128, 128, 8
        $region48: #{tpu_custom_call.1} parent=11 // pred_fallthru
          _
        // Predicated region
        $region49: #{tpu_custom_call.1} parent=11 // pred_check
          %p475 = pneg %p293
        $region50: #{tpu_custom_call.1} parent=11 // pred_check_branch
          %477 = sbr.rel (%p475) target = $region52
        $region51: #{tpu_custom_call.1} parent=11 // pred_region
          _
        $region52: #{tpu_custom_call.1} parent=11 // pred_fallthru
          _
        // Predicated region
        $region53: #{tpu_custom_call.1} parent=11 // pred_check
          %p478 = pneg %p314
        $region54: #{tpu_custom_call.1} parent=11 // pred_check_branch
          %480 = sbr.rel (%p478) target = $region56
        $region55: #{tpu_custom_call.1} parent=11 // pred_region
          %s482 = ssub.s32 2048, 2048
          %483 = vsyncadd [#allocation9], %s482
          %s484 = sshll.u32 [#allocation10], 4
          %s485 = int_to_ptr.vmem [resolvable:$true] %s484
          %490 = dma.hbm_to_vmem [thread:$0]  %s12, 2048, %s485, [#allocation9], 128, 128, 8
        $region56: #{tpu_custom_call.1} parent=11 // pred_fallthru
          _
        // Predicated region
        $region57: #{tpu_custom_call.1} parent=11 // pred_check
          %p491 = pneg %p335
        $region58: #{tpu_custom_call.1} parent=11 // pred_check_branch
          %493 = sbr.rel (%p491) target = $region60
        $region59: #{tpu_custom_call.1} parent=11 // pred_region
          _
        $region60: #{tpu_custom_call.1} parent=11 // pred_fallthru
          _
        // Predicated region
        $region61: #{tpu_custom_call.1} parent=11 // pred_check
          %p494 = pneg %p356
        $region62: #{tpu_custom_call.1} parent=11 // pred_check_branch
          %496 = sbr.rel (%p494) target = $region64
        $region63: #{tpu_custom_call.1} parent=11 // pred_region
          %s498 = ssub.s32 2048, 2048
          %499 = vsyncadd [#allocation12], %s498
          %s500 = sshll.u32 [#allocation11], 4
          %s501 = int_to_ptr.vmem [resolvable:$true] %s500
          %506 = dma.hbm_to_vmem [thread:$0]  %s14, 2048, %s501, [#allocation12], 128, 128, 8
        $region64: #{tpu_custom_call.1} parent=11 // pred_fallthru
          _
        // Predicated region
        $region65: #{tpu_custom_call.1} parent=11 // pred_check
          %p507 = pneg %p377
        $region66: #{tpu_custom_call.1} parent=11 // pred_check_branch
          %509 = sbr.rel (%p507) target = $region68
        $region67: #{tpu_custom_call.1} parent=11 // pred_region
          _
        $region68: #{tpu_custom_call.1} parent=11 // pred_fallthru
          _
      $region12: #{tpu_custom_call.1} parent=5 // pred_fallthru
        _
      %p510 = scmp.lt.s32.totalorder %s31, 2
      // Predicated region
      $region69: #{tpu_custom_call.1} parent=5 // pred_check
        %p511 = pneg %p510
      $region70: #{tpu_custom_call.1} parent=5 // pred_check_branch
        %513 = sbr.rel (%p511) target = $region72
      $region71: #{tpu_custom_call.1} parent=5 // pred_region
        // Predicated region
        $region73: #{tpu_custom_call.1} parent=71 // pred_check
          %p514 = pneg %p51
        $region74: #{tpu_custom_call.1} parent=71 // pred_check_branch
          %516 = sbr.rel (%p514) target = $region76
        $region75: #{tpu_custom_call.1} parent=71 // pred_region
          %s517 = sand.u32 %s41, 1
          %s518 = scalar_lea.sflag [#allocation3], %s517
          %s519 = sand.u32 %s41, 1
          %s520 = smul.addr %s519, 48
          %s521 = scalar_lea.vmem [#allocation2], %s520
          %s523 = ssub.s32 768, 768
          %524 = vsyncadd %s518, %s523
          %s525 = smul.addr %s31, 6
          %s526 = smul.addr %s525, 128
          %s527 = scalar_lea.hbm %s0, %s526
          %s528 = sshll.u32 %s521, 4
          %s529 = int_to_ptr.vmem [resolvable:$true] %s528
          %534 = dma.hbm_to_vmem [thread:$0]  %s527, 768, %s529, %s518, 384, 384, 24
        $region76: #{tpu_custom_call.1} parent=71 // pred_fallthru
          _
        // Predicated region
        $region77: #{tpu_custom_call.1} parent=71 // pred_check
          %p535 = pneg %p77
        $region78: #{tpu_custom_call.1} parent=71 // pred_check_branch
          %537 = sbr.rel (%p535) target = $region80
        $region79: #{tpu_custom_call.1} parent=71 // pred_region
          %p538 = scmp.lt.s32.totalorder %s31, 1
          %s539 = scalar_select %p538, %s31, 1
          %s540 = smul.addr %s539, 2
          %s541 = smul.addr %s540, 8
          %s542 = scalar_lea.vmem %s1, %s541
        $region80: #{tpu_custom_call.1} parent=71 // pred_fallthru
          _
      $region72: #{tpu_custom_call.1} parent=5 // pred_fallthru
        _
      %p543 = scmp.le.s32.totalorder 1, %s31
      %p544 = scmp.lt.s32.totalorder %s31, 3
      %p545 = pnand %p543, %p544
      %p546 = pneg %p545
      // Predicated region
      $region81: #{tpu_custom_call.1} parent=5 // pred_check
        _
      $region82: #{tpu_custom_call.1} parent=5 // pred_check_branch
        %548 = sbr.rel (%p545) target = $region84
      $region83: #{tpu_custom_call.1} parent=5 // pred_region
        %s549 = ssub.s32 %s31, 1
        %s550 = sand.u32 %s44, 1
        %s551 = scalar_lea.sflag [#allocation3], %s550
        %s552 = sand.u32 %s44, 1
        %s553 = smul.addr %s552, 48
        %s554 = scalar_lea.vmem [#allocation2], %s553
        // Predicated region
        $region85: #{tpu_custom_call.1} parent=83 // pred_check
          %p555 = pneg %p57
        $region86: #{tpu_custom_call.1} parent=83 // pred_check_branch
          %557 = sbr.rel (%p555) target = $region88
        $region87: #{tpu_custom_call.1} parent=83 // pred_region
          %558 = dma.done %s551, 768
        $region88: #{tpu_custom_call.1} parent=83 // pred_fallthru
          _
        // Predicated region
        $region89: #{tpu_custom_call.1} parent=83 // pred_check
          %p559 = pneg %p188
        $region90: #{tpu_custom_call.1} parent=83 // pred_check_branch
          %561 = sbr.rel (%p559) target = $region92
        $region91: #{tpu_custom_call.1} parent=83 // pred_region
          %562 = dma.done [#allocation6], 6144
        $region92: #{tpu_custom_call.1} parent=83 // pred_fallthru
          _
        // Predicated region
        $region93: #{tpu_custom_call.1} parent=83 // pred_check
          %p563 = pneg %p230
        $region94: #{tpu_custom_call.1} parent=83 // pred_check_branch
          %565 = sbr.rel (%p563) target = $region96
        $region95: #{tpu_custom_call.1} parent=83 // pred_region
          %566 = dma.done [#allocation6], 2048
        $region96: #{tpu_custom_call.1} parent=83 // pred_fallthru
          _
        // Predicated region
        $region97: #{tpu_custom_call.1} parent=83 // pred_check
          %p567 = pneg %p272
        $region98: #{tpu_custom_call.1} parent=83 // pred_check_branch
          %569 = sbr.rel (%p567) target = $region100
        $region99: #{tpu_custom_call.1} parent=83 // pred_region
          %570 = dma.done [#allocation9], 2048
        $region100: #{tpu_custom_call.1} parent=83 // pred_fallthru
          _
        // Predicated region
        $region101: #{tpu_custom_call.1} parent=83 // pred_check
          %p571 = pneg %p314
        $region102: #{tpu_custom_call.1} parent=83 // pred_check_branch
          %573 = sbr.rel (%p571) target = $region104
        $region103: #{tpu_custom_call.1} parent=83 // pred_region
          %574 = dma.done [#allocation9], 2048
        $region104: #{tpu_custom_call.1} parent=83 // pred_fallthru
          _
        // Predicated region
        $region105: #{tpu_custom_call.1} parent=83 // pred_check
          %p575 = pneg %p356
        $region106: #{tpu_custom_call.1} parent=83 // pred_check_branch
          %577 = sbr.rel (%p575) target = $region108
        $region107: #{tpu_custom_call.1} parent=83 // pred_region
          %578 = dma.done [#allocation12], 2048
        $region108: #{tpu_custom_call.1} parent=83 // pred_fallthru
          _
        %s579 = sand.u32 %s44, 1
        %s580 = scalar_lea.sflag [#allocation3], %s579
        %s581 = sand.u32 %s44, 1
        %s582 = smul.addr %s581, 48
        %s583 = scalar_lea.vmem [#allocation2], %s582
        %p584 = pneg %p57
        %p585 = pneg %p54
        %p586 = scmp.lt.s32.totalorder %s36, 1
        %s587 = scalar_select %p586, %s36, 1
        %s588 = smul.addr %s587, 2
        %s589 = smul.addr %s588, 8
        %s590 = scalar_lea.vmem %s1, %s589
        %p591 = pneg %p83
        %p592 = pneg %p80
        %p593 = pneg %p104
        %p594 = pneg %p101
        %p595 = pneg %p125
        %p596 = pneg %p122
        %p597 = pneg %p146
        %p598 = pneg %p143
        %p599 = pneg %p167
        %p600 = pneg %p164
        %p601 = pneg %p188
        %p602 = pneg %p185
        %p603 = pneg %p209
        %p604 = pneg %p206
        %p605 = pneg %p230
        %p606 = pneg %p227
        %p607 = pneg %p251
        %p608 = pneg %p248
        %p609 = pneg %p272
        %p610 = pneg %p269
        %p611 = pneg %p293
        %p612 = pneg %p290
        %p613 = pneg %p314
        %p614 = pneg %p311
        %p615 = pneg %p335
        %p616 = pneg %p332
        %p617 = pneg %p356
        %p618 = pneg %p353
        %p619 = pneg %p377
        %p620 = pneg %p374
        %p621 = pneg %p403
        %p622 = pneg %p400
        %s623 = sand.u32 %s390, 1
        %s624 = scalar_lea.sflag [#allocation4], %s623
        %s625 = sand.u32 %s390, 1
        %s626 = scalar_lea.vmem [#allocation13], %s625
        %p627 = scmp.lt.s32.totalorder %s36, 1
        %s628 = scalar_select %p627, %s36, 1
        %s629 = smul.addr %s628, 2
        %s630 = smul.addr %s629, 8
        %s631 = scalar_lea.vmem %s1, %s630
        %v632 = vld [vmem:[%s554] sm:$0xff]
        %v633 = vld [vmem:[%s554 + $0x8] sm:$0xff]
        %v634 = vld [vmem:[%s554 + $0x10] sm:$0xff]
        %v635 = vld [vmem:[%s554 + $0x18] sm:$0xff]
        %v636 = vld [vmem:[%s554 + $0x20] sm:$0xff]
        %v637 = vld [vmem:[%s554 + $0x28] sm:$0xff]
        %v638 = vld [vmem:[%s631] sm:$0xff]
        %v639 = vld [vmem:[%s631 + $0x8] sm:$0xff]
        %v640 = vld [vmem:[%s2] sm:$0x3f]
        %v642 = vcombine.high %v640, %v640
        %v644 = vunpack.c.l.s4 1983009808
        %v645 = vunpack.c.0.s8 %v644
        %v646 = vlaneseq
        %v647 = vshrl.u32 %v646, 7
        %v648 = vsub.s32 %v645, %v647
        %v649 = vrot.slane %v640, %v648
        %v651 = vunpack.c.l.s4 1983009808
        %v652 = vunpack.c.0.s8 %v651
        %v653 = vlaneseq
        %v654 = vshrl.u32 %v653, 7
        %v655 = vsub.s32 %v652, %v654
        %v656 = vrot.slane %v642, %v655
        %v657 = vcombine.high %v649, %v649
        %661 = vmatprep.subr.mxu0 %v657
        %662 = vmatpush1.xpose.msra.mxu0 %v649
        %663 = vmatprep.subr.mxu0 0.0
        %664 = vmatpush1.xpose.msra.mxu0 0.0
        %665 = vmatprep.subr.mxu0 0.0
        %666 = vmatpush1.xpose.msra.mxu0 0.0
        %667 = vmatprep.subr.mxu0 0.0
        %668 = vmatpush1.xpose.msra.mxu0 0.0
        %669 = vmatprep.subr.mxu0 0.0
        %670 = vmatpush1.xpose.msra.mxu0 0.0
        %671 = vmatprep.subr.mxu0 0.0
        %672 = vmatpush1.xpose.msra.mxu0 0.0
        %673 = vmatprep.subr.mxu0 0.0
        %674 = vmatpush1.xpose.msra.mxu0 0.0
        %675 = vmatprep.subr.mxu0 0.0
        %676 = vmatpush1.xpose.msra.mxu0 0.0
        %677 = vmatprep.subr.mxu0 0.0
        %678 = vmatpush1.xpose.msra.mxu0 0.0
        %679 = vmatprep.subr.mxu0 0.0
        %680 = vmatpush1.xpose.msra.mxu0 0.0
        %681 = vmatprep.subr.mxu0 0.0
        %682 = vmatpush1.xpose.msra.mxu0 0.0
        %683 = vmatprep.subr.mxu0 0.0
        %684 = vmatpush1.xpose.msra.mxu0 0.0
        %685 = vmatprep.subr.mxu0 0.0
        %686 = vmatpush1.xpose.msra.mxu0 0.0
        %687 = vmatprep.subr.mxu0 0.0
        %688 = vmatpush1.xpose.msra.mxu0 0.0
        %689 = vmatprep.subr.mxu0 0.0
        %690 = vmatpush1.xpose.msra.mxu0 0.0
        %691 = vmatprep.subr.mxu0 0.0
        %692 = vmatpush1.xpose.msra.mxu0 0.0
        %693 = vmatprep.subr.mxu0 0.0
        %694 = vmatpush1.xpose.msra.mxu0 0.0
        %695 = vmatprep.subr.mxu0 0.0
        %696 = vmatpush1.xpose.msra.mxu0 0.0
        %697 = vmatprep.subr.mxu0 0.0
        %698 = vmatpush1.xpose.msra.mxu0 0.0
        %699 = vmatprep.subr.mxu0 0.0
        %700 = vmatpush1.xpose.msra.mxu0 0.0
        %701 = vmatprep.subr.mxu0 0.0
        %702 = vmatpush1.xpose.msra.mxu0 0.0
        %703 = vmatprep.subr.mxu0 0.0
        %704 = vmatpush1.xpose.msra.mxu0 0.0
        %705 = vmatprep.subr.mxu0 0.0
        %706 = vmatpush1.xpose.msra.mxu0 0.0
        %707 = vmatprep.subr.mxu0 0.0
        %708 = vmatpush1.xpose.msra.mxu0 0.0
        %709 = vmatprep.subr.mxu0 0.0
        %710 = vmatpush1.xpose.msra.mxu0 0.0
        %711 = vmatprep.subr.mxu0 0.0
        %712 = vmatpush1.xpose.msra.mxu0 0.0
        %713 = vmatprep.subr.mxu0 0.0
        %714 = vmatpush1.xpose.msra.mxu0 0.0
        %715 = vmatprep.subr.mxu0 0.0
        %716 = vmatpush1.xpose.msra.mxu0 0.0
        %717 = vmatprep.subr.mxu0 0.0
        %718 = vmatpush1.xpose.msra.mxu0 0.0
        %719 = vmatprep.subr.mxu0 0.0
        %720 = vmatpush1.xpose.msra.mxu0 0.0
        %721 = vmatprep.subr.mxu0 0.0
        %722 = vmatpush1.xpose.msra.mxu0 0.0
        %723 = vmatprep.subr.mxu0 0.0
        %724 = vmatpush1.xpose.msra.mxu0 0.0
        %725 = vmatprep.mubr.f32.mxu0 %v633
        %726 = vmatmul.mubr.f32.gmra.mrb[0].mxu0 %v632
        %v727 = vpop.f32.mrb[0].mxu0
        %v728 = vadd.f32 0.0, %v727
        %v729 = vpop.f32.mrb[0].mxu0
        %730 = vmatprep.mubr.f32.mxu0 %v636
        %731 = vmatmul.mubr.f32.gmra.mrb[0].mxu0 %v635
        %v732 = vpop.f32.mrb[0].mxu0
        %v733 = vadd.f32 0.0, %v732
        %v734 = vpop.f32.mrb[0].mxu0
        %735 = vdwg.mxu0
        %736 = vmatprep.subr.mxu0 0.0
        %737 = vmatpush1.xpose.msra.mxu0 %v656
        %738 = vmatprep.subr.mxu0 0.0
        %739 = vmatpush1.xpose.msra.mxu0 0.0
        %740 = vmatprep.subr.mxu0 0.0
        %741 = vmatpush1.xpose.msra.mxu0 0.0
        %742 = vmatprep.subr.mxu0 0.0
        %743 = vmatpush1.xpose.msra.mxu0 0.0
        %744 = vmatprep.subr.mxu0 0.0
        %745 = vmatpush1.xpose.msra.mxu0 0.0
        %746 = vmatprep.subr.mxu0 0.0
        %747 = vmatpush1.xpose.msra.mxu0 0.0
        %748 = vmatprep.subr.mxu0 0.0
        %749 = vmatpush1.xpose.msra.mxu0 0.0
        %750 = vmatprep.subr.mxu0 0.0
        %751 = vmatpush1.xpose.msra.mxu0 0.0
        %752 = vmatprep.subr.mxu0 0.0
        %753 = vmatpush1.xpose.msra.mxu0 0.0
        %754 = vmatprep.subr.mxu0 0.0
        %755 = vmatpush1.xpose.msra.mxu0 0.0
        %756 = vmatprep.subr.mxu0 0.0
        %757 = vmatpush1.xpose.msra.mxu0 0.0
        %758 = vmatprep.subr.mxu0 0.0
        %759 = vmatpush1.xpose.msra.mxu0 0.0
        %760 = vmatprep.subr.mxu0 0.0
        %761 = vmatpush1.xpose.msra.mxu0 0.0
        %762 = vmatprep.subr.mxu0 0.0
        %763 = vmatpush1.xpose.msra.mxu0 0.0
        %764 = vmatprep.subr.mxu0 0.0
        %765 = vmatpush1.xpose.msra.mxu0 0.0
        %766 = vmatprep.subr.mxu0 0.0
        %767 = vmatpush1.xpose.msra.mxu0 0.0
        %768 = vmatprep.subr.mxu0 0.0
        %769 = vmatpush1.xpose.msra.mxu0 0.0
        %770 = vmatprep.subr.mxu0 0.0
        %771 = vmatpush1.xpose.msra.mxu0 0.0
        %772 = vmatprep.subr.mxu0 0.0
        %773 = vmatpush1.xpose.msra.mxu0 0.0
        %774 = vmatprep.subr.mxu0 0.0
        %775 = vmatpush1.xpose.msra.mxu0 0.0
        %776 = vmatprep.subr.mxu0 0.0
        %777 = vmatpush1.xpose.msra.mxu0 0.0
        %778 = vmatprep.subr.mxu0 0.0
        %779 = vmatpush1.xpose.msra.mxu0 0.0
        %780 = vmatprep.subr.mxu0 0.0
        %781 = vmatpush1.xpose.msra.mxu0 0.0
        %782 = vmatprep.subr.mxu0 0.0
        %783 = vmatpush1.xpose.msra.mxu0 0.0
        %784 = vmatprep.subr.mxu0 0.0
        %785 = vmatpush1.xpose.msra.mxu0 0.0
        %786 = vmatprep.subr.mxu0 0.0
        %787 = vmatpush1.xpose.msra.mxu0 0.0
        %788 = vmatprep.subr.mxu0 0.0
        %789 = vmatpush1.xpose.msra.mxu0 0.0
        %790 = vmatprep.subr.mxu0 0.0
        %791 = vmatpush1.xpose.msra.mxu0 0.0
        %792 = vmatprep.subr.mxu0 0.0
        %793 = vmatpush1.xpose.msra.mxu0 0.0
        %794 = vmatprep.subr.mxu0 0.0
        %795 = vmatpush1.xpose.msra.mxu0 0.0
        %796 = vmatprep.subr.mxu0 0.0
        %797 = vmatpush1.xpose.msra.mxu0 0.0
        %798 = vmatprep.subr.mxu0 0.0
        %799 = vmatpush1.xpose.msra.mxu0 0.0
        %800 = vmatprep.mubr.f32.mxu0 0.0
        %801 = vmatmul.mubr.f32.gmra.mrb[0].mxu0 %v634
        %v802 = vpop.f32.mrb[0].mxu0
        %v803 = vadd.f32 %v728, %v802
        %v804 = vpop.f32.mrb[0].mxu0
        %805 = vmatprep.mubr.f32.mxu0 0.0
        %806 = vmatmul.mubr.f32.gmra.mrb[0].mxu0 %v637
        %v807 = vpop.f32.mrb[0].mxu0
        %v808 = vadd.f32 %v733, %v807
        %v809 = vpop.f32.mrb[0].mxu0
        %810 = vdwg.mxu0
        %v811 = vmul.f32 %v632, %v632
        %v812 = vmul.f32 %v633, %v633
        %v813 = vmul.f32 %v634, %v634
        %v814 = vmul.f32 %v635, %v635
        %v815 = vmul.f32 %v636, %v636
        %v816 = vmul.f32 %v637, %v637
        %v817 = vadd.f32 %v811, %v812
        %v818 = vadd.f32 %v817, %v813
        %819 = vadd.xlane.f32.xlu0 %v818
        %v820 = vpop.xlane.xlu0 %819
        %v821 = vadd.f32 %v814, %v815
        %v822 = vadd.f32 %v821, %v816
        %823 = vadd.xlane.f32.xlu0 %v822
        %v824 = vpop.xlane.xlu0 %823
        %v825 = vld [vmem:[%s3] sm:$0x1]
        %v827 = vlaneseq
        %v828 = vshrl.u32 %v827, 7
        %v829 = vsub.s32 0, %v828
        %v830 = vrot.slane %v825, %v829
        %v832 = vadd.f32 %v820, %v830
        %v833 = vadd.f32 %v824, %v830
        %v834 = vmul.f32 %v803, 2.0
        %v835 = vmul.f32 %v808, 2.0
        %v836 = vsub.f32 %v832, %v834
        %v837 = vsub.f32 %v833, %v835
        %v838 = vmax.f32 %v836, 0.0
        %v839 = vmax.f32 %v837, 0.0
        %v840 = vadd.f32 %v838, 1.0
        %v841 = vadd.f32 %v839, 1.0
        %v842 = vrcp.pop %v840
        %v843 = vrcp.pop %v841
        %v844 = vld [vmem:[%s4] sm:$0x3]
        %vm845 = vcmask 15360
        %v847 = vsel %vm845, %v842, 0
        %v850 = vsel %vm845, %v843, 0
        %vm852 = vcmask 1041408
        %v854 = vsel %vm852, %v844, 0
        %856 = vmatprep.subr.mxu0 0.0
        %857 = vmatpush1.msra.mxu0 %v854
        %858 = vmatprep.subr.mxu0 0.0
        %859 = vmatpush1.msra.mxu0 0.0
        %860 = vmatprep.subr.mxu0 0.0
        %861 = vmatpush1.msra.mxu0 0.0
        %862 = vmatprep.subr.mxu0 0.0
        %863 = vmatpush1.msra.mxu0 0.0
        %864 = vmatprep.subr.mxu0 0.0
        %865 = vmatpush1.msra.mxu0 0.0
        %866 = vmatprep.subr.mxu0 0.0
        %867 = vmatpush1.msra.mxu0 0.0
        %868 = vmatprep.subr.mxu0 0.0
        %869 = vmatpush1.msra.mxu0 0.0
        %870 = vmatprep.subr.mxu0 0.0
        %871 = vmatpush1.msra.mxu0 0.0
        %872 = vmatprep.subr.mxu0 0.0
        %873 = vmatpush1.msra.mxu0 0.0
        %874 = vmatprep.subr.mxu0 0.0
        %875 = vmatpush1.msra.mxu0 0.0
        %876 = vmatprep.subr.mxu0 0.0
        %877 = vmatpush1.msra.mxu0 0.0
        %878 = vmatprep.subr.mxu0 0.0
        %879 = vmatpush1.msra.mxu0 0.0
        %880 = vmatprep.subr.mxu0 0.0
        %881 = vmatpush1.msra.mxu0 0.0
        %882 = vmatprep.subr.mxu0 0.0
        %883 = vmatpush1.msra.mxu0 0.0
        %884 = vmatprep.subr.mxu0 0.0
        %885 = vmatpush1.msra.mxu0 0.0
        %886 = vmatprep.subr.mxu0 0.0
        %887 = vmatpush1.msra.mxu0 0.0
        %888 = vmatprep.subr.mxu0 0.0
        %889 = vmatpush1.msra.mxu0 0.0
        %890 = vmatprep.subr.mxu0 0.0
        %891 = vmatpush1.msra.mxu0 0.0
        %892 = vmatprep.subr.mxu0 0.0
        %893 = vmatpush1.msra.mxu0 0.0
        %894 = vmatprep.subr.mxu0 0.0
        %895 = vmatpush1.msra.mxu0 0.0
        %896 = vmatprep.subr.mxu0 0.0
        %897 = vmatpush1.msra.mxu0 0.0
        %898 = vmatprep.subr.mxu0 0.0
        %899 = vmatpush1.msra.mxu0 0.0
        %900 = vmatprep.subr.mxu0 0.0
        %901 = vmatpush1.msra.mxu0 0.0
        %902 = vmatprep.subr.mxu0 0.0
        %903 = vmatpush1.msra.mxu0 0.0
        %904 = vmatprep.subr.mxu0 0.0
        %905 = vmatpush1.msra.mxu0 0.0
        %906 = vmatprep.subr.mxu0 0.0
        %907 = vmatpush1.msra.mxu0 0.0
        %908 = vmatprep.subr.mxu0 0.0
        %909 = vmatpush1.msra.mxu0 0.0
        %910 = vmatprep.subr.mxu0 0.0
        %911 = vmatpush1.msra.mxu0 0.0
        %912 = vmatprep.subr.mxu0 0.0
        %913 = vmatpush1.msra.mxu0 0.0
        %914 = vmatprep.subr.mxu0 0.0
        %915 = vmatpush1.msra.mxu0 0.0
        %916 = vmatprep.subr.mxu0 0.0
        %917 = vmatpush1.msra.mxu0 0.0
        %918 = vmatprep.subr.mxu0 0.0
        %919 = vmatpush1.msra.mxu0 0.0
        %920 = vmatprep.mubr.f32.mxu0 0.0
        %921 = vmatmul.mubr.f32.gmra.mrb[0].mxu0 %v847
        %v922 = vpop.f32.mrb[0].mxu0
        %v923 = vadd.f32 0.0, %v922
        %v924 = vpop.f32.mrb[0].mxu0
        %925 = vmatprep.mubr.f32.mxu0 0.0
        %926 = vmatmul.mubr.f32.gmra.mrb[0].mxu0 %v850
        %v927 = vpop.f32.mrb[0].mxu0
        %v928 = vadd.f32 0.0, %v927
        %v929 = vpop.f32.mrb[0].mxu0
        %930 = vdwg.mxu0
        %v931 = vrcp.pop %v923
        %v932 = vrcp.pop %v928
        %v933 = vmul.f32 %v842, %v931
        %v934 = vmul.f32 %v843, %v932
        %v935 = vld [vmem:[%s5] sm:$0x3]
        %v937 = vsel %vm845, %v933, 0
        %v940 = vsel %vm845, %v934, 0
        %v943 = vsel %vm852, %v935, 0
        %945 = vmatprep.subr.mxu0 0.0
        %946 = vmatpush1.msra.mxu0 %v943
        %947 = vmatprep.subr.mxu0 0.0
        %948 = vmatpush1.msra.mxu0 0.0
        %949 = vmatprep.subr.mxu0 0.0
        %950 = vmatpush1.msra.mxu0 0.0
        %951 = vmatprep.subr.mxu0 0.0
        %952 = vmatpush1.msra.mxu0 0.0
        %953 = vmatprep.subr.mxu0 0.0
        %954 = vmatpush1.msra.mxu0 0.0
        %955 = vmatprep.subr.mxu0 0.0
        %956 = vmatpush1.msra.mxu0 0.0
        %957 = vmatprep.subr.mxu0 0.0
        %958 = vmatpush1.msra.mxu0 0.0
        %959 = vmatprep.subr.mxu0 0.0
        %960 = vmatpush1.msra.mxu0 0.0
        %961 = vmatprep.subr.mxu0 0.0
        %962 = vmatpush1.msra.mxu0 0.0
        %963 = vmatprep.subr.mxu0 0.0
        %964 = vmatpush1.msra.mxu0 0.0
        %965 = vmatprep.subr.mxu0 0.0
        %966 = vmatpush1.msra.mxu0 0.0
        %967 = vmatprep.subr.mxu0 0.0
        %968 = vmatpush1.msra.mxu0 0.0
        %969 = vmatprep.subr.mxu0 0.0
        %970 = vmatpush1.msra.mxu0 0.0
        %971 = vmatprep.subr.mxu0 0.0
        %972 = vmatpush1.msra.mxu0 0.0
        %973 = vmatprep.subr.mxu0 0.0
        %974 = vmatpush1.msra.mxu0 0.0
        %975 = vmatprep.subr.mxu0 0.0
        %976 = vmatpush1.msra.mxu0 0.0
        %977 = vmatprep.subr.mxu0 0.0
        %978 = vmatpush1.msra.mxu0 0.0
        %979 = vmatprep.subr.mxu0 0.0
        %980 = vmatpush1.msra.mxu0 0.0
        %981 = vmatprep.subr.mxu0 0.0
        %982 = vmatpush1.msra.mxu0 0.0
        %983 = vmatprep.subr.mxu0 0.0
        %984 = vmatpush1.msra.mxu0 0.0
        %985 = vmatprep.subr.mxu0 0.0
        %986 = vmatpush1.msra.mxu0 0.0
        %987 = vmatprep.subr.mxu0 0.0
        %988 = vmatpush1.msra.mxu0 0.0
        %989 = vmatprep.subr.mxu0 0.0
        %990 = vmatpush1.msra.mxu0 0.0
        %991 = vmatprep.subr.mxu0 0.0
        %992 = vmatpush1.msra.mxu0 0.0
        %993 = vmatprep.subr.mxu0 0.0
        %994 = vmatpush1.msra.mxu0 0.0
        %995 = vmatprep.subr.mxu0 0.0
        %996 = vmatpush1.msra.mxu0 0.0
        %997 = vmatprep.subr.mxu0 0.0
        %998 = vmatpush1.msra.mxu0 0.0
        %999 = vmatprep.subr.mxu0 0.0
        %1000 = vmatpush1.msra.mxu0 0.0
        %1001 = vmatprep.subr.mxu0 0.0
        %1002 = vmatpush1.msra.mxu0 0.0
        %1003 = vmatprep.subr.mxu0 0.0
        %1004 = vmatpush1.msra.mxu0 0.0
        %1005 = vmatprep.subr.mxu0 0.0
        %1006 = vmatpush1.msra.mxu0 0.0
        %1007 = vmatprep.subr.mxu0 0.0
        %1008 = vmatpush1.msra.mxu0 0.0
        %1009 = vmatprep.mubr.f32.mxu0 0.0
        %1010 = vmatmul.mubr.f32.gmra.mrb[0].mxu0 %v937
        %v1011 = vpop.f32.mrb[0].mxu0
        %v1012 = vadd.f32 0.0, %v1011
        %v1013 = vpop.f32.mrb[0].mxu0
        %1014 = vmatprep.mubr.f32.mxu0 0.0
        %1015 = vmatmul.mubr.f32.gmra.mrb[0].mxu0 %v940
        %v1016 = vpop.f32.mrb[0].mxu0
        %v1017 = vadd.f32 0.0, %v1016
        %v1018 = vpop.f32.mrb[0].mxu0
        %1019 = vdwg.mxu0
        %v1020 = vsub.f32 %v1012, %v1012
        %v1021 = vsub.f32 %v1017, %v1017
        %v1022 = vmul.f32 %v1020, 1.442695
        %v1023 = vpow.pop %v1022
        %v1024 = vmul.f32 %v1021, 1.442695
        %v1025 = vpow.pop %v1024
        %v1026 = vadd.f32 %v1023, 0.0
        %v1027 = vadd.f32 %v1025, 0.0
        %v1028 = vrcp.pop %v1026
        %v1029 = vrcp.pop %v1027
        %v1030 = vmul.f32 %v1023, %v1028
        %v1031 = vmul.f32 %v1025, %v1029
        %v1032 = vmul.f32 %v638, %v1030
        %v1033 = vmul.f32 %v639, %v1031
        %1034 = vxpose.xlu0.b32.start [1/16] %v1032, 128
        %1035 = vxpose.xlu0.b32.cont [2/16] %v1033, 128
        %1036 = vxpose.xlu0.b32.cont [3/16] 0.0, 128
        %1037 = vxpose.xlu0.b32.cont [4/16] 0.0, 128
        %1038 = vxpose.xlu0.b32.cont [5/16] 0.0, 128
        %1039 = vxpose.xlu0.b32.cont [6/16] 0.0, 128
        %1040 = vxpose.xlu0.b32.cont [7/16] 0.0, 128
        %1041 = vxpose.xlu0.b32.cont [8/16] 0.0, 128
        %1042 = vxpose.xlu0.b32.cont [9/16] 0.0, 128
        %1043 = vxpose.xlu0.b32.cont [10/16] 0.0, 128
        %1044 = vxpose.xlu0.b32.cont [11/16] 0.0, 128
        %1045 = vxpose.xlu0.b32.cont [12/16] 0.0, 128
        %1046 = vxpose.xlu0.b32.cont [13/16] 0.0, 128
        %1047 = vxpose.xlu0.b32.cont [14/16] 0.0, 128
        %1048 = vxpose.xlu0.b32.cont [15/16] 0.0, 128
        %1049 = vxpose.xlu0.b32.end [16/16] 0.0, 128
        %v1050 = vpop.trf.xlu0
        %v1051 = vpop.trf.xlu0
        %v1052 = vpop.trf.xlu0
        %v1053 = vpop.trf.xlu0
        %v1054 = vpop.trf.xlu0
        %v1055 = vpop.trf.xlu0
        %v1056 = vpop.trf.xlu0
        %v1057 = vpop.trf.xlu0
        %v1058 = vpop.trf.xlu0
        %v1059 = vpop.trf.xlu0
        %v1060 = vpop.trf.xlu0
        %v1061 = vpop.trf.xlu0
        %v1062 = vpop.trf.xlu0
        %v1063 = vpop.trf.xlu0
        %v1064 = vpop.trf.xlu0
        %v1065 = vpop.trf.xlu0
        %vm1066 = vcmask 130048
        %v1068 = vsel %vm1066, %v1050, 0
        %1070 = vmatprep.subr.mxu0 %v633
        %1071 = vmatpush1.msra.mxu0 %v632
        %1072 = vmatprep.subr.mxu0 %v636
        %1073 = vmatpush1.msra.mxu0 %v635
        %1074 = vmatprep.subr.mxu0 0.0
        %1075 = vmatpush1.msra.mxu0 0.0
        %1076 = vmatprep.subr.mxu0 0.0
        %1077 = vmatpush1.msra.mxu0 0.0
        %1078 = vmatprep.subr.mxu0 0.0
        %1079 = vmatpush1.msra.mxu0 0.0
        %1080 = vmatprep.subr.mxu0 0.0
        %1081 = vmatpush1.msra.mxu0 0.0
        %1082 = vmatprep.subr.mxu0 0.0
        %1083 = vmatpush1.msra.mxu0 0.0
        %1084 = vmatprep.subr.mxu0 0.0
        %1085 = vmatpush1.msra.mxu0 0.0
        %1086 = vmatprep.subr.mxu0 0.0
        %1087 = vmatpush1.msra.mxu0 0.0
        %1088 = vmatprep.subr.mxu0 0.0
        %1089 = vmatpush1.msra.mxu0 0.0
        %1090 = vmatprep.subr.mxu0 0.0
        %1091 = vmatpush1.msra.mxu0 0.0
        %1092 = vmatprep.subr.mxu0 0.0
        %1093 = vmatpush1.msra.mxu0 0.0
        %1094 = vmatprep.subr.mxu0 0.0
        %1095 = vmatpush1.msra.mxu0 0.0
        %1096 = vmatprep.subr.mxu0 0.0
        %1097 = vmatpush1.msra.mxu0 0.0
        %1098 = vmatprep.subr.mxu0 0.0
        %1099 = vmatpush1.msra.mxu0 0.0
        %1100 = vmatprep.subr.mxu0 0.0
        %1101 = vmatpush1.msra.mxu0 0.0
        %1102 = vmatprep.subr.mxu0 0.0
        %1103 = vmatpush1.msra.mxu0 0.0
        %1104 = vmatprep.subr.mxu0 0.0
        %1105 = vmatpush1.msra.mxu0 0.0
        %1106 = vmatprep.subr.mxu0 0.0
        %1107 = vmatpush1.msra.mxu0 0.0
        %1108 = vmatprep.subr.mxu0 0.0
        %1109 = vmatpush1.msra.mxu0 0.0
        %1110 = vmatprep.subr.mxu0 0.0
        %1111 = vmatpush1.msra.mxu0 0.0
        %1112 = vmatprep.subr.mxu0 0.0
        %1113 = vmatpush1.msra.mxu0 0.0
        %1114 = vmatprep.subr.mxu0 0.0
        %1115 = vmatpush1.msra.mxu0 0.0
        %1116 = vmatprep.subr.mxu0 0.0
        %1117 = vmatpush1.msra.mxu0 0.0
        %1118 = vmatprep.subr.mxu0 0.0
        %1119 = vmatpush1.msra.mxu0 0.0
        %1120 = vmatprep.subr.mxu0 0.0
        %1121 = vmatpush1.msra.mxu0 0.0
        %1122 = vmatprep.subr.mxu0 0.0
        %1123 = vmatpush1.msra.mxu0 0.0
        %1124 = vmatprep.subr.mxu0 0.0
        %1125 = vmatpush1.msra.mxu0 0.0
        %1126 = vmatprep.subr.mxu0 0.0
        %1127 = vmatpush1.msra.mxu0 0.0
        %1128 = vmatprep.subr.mxu0 0.0
        %1129 = vmatpush1.msra.mxu0 0.0
        %1130 = vmatprep.subr.mxu0 0.0
        %1131 = vmatpush1.msra.mxu0 0.0
        %1132 = vmatprep.subr.mxu0 0.0
        %1133 = vmatpush1.msra.mxu0 0.0
        %1134 = vmatprep.mubr.f32.mxu0 0.0
        %1135 = vmatmul.mubr.f32.gmra.mrb[0].mxu0 %v1068
        %v1136 = vpop.f32.mrb[0].mxu0
        %v1137 = vadd.f32 0.0, %v1136
        %v1138 = vpop.f32.mrb[0].mxu0
        %v1139 = vadd.f32 0.0, %v1138
        %1140 = vdwg.mxu0
        %1141 = vmatprep.subr.mxu0 0.0
        %1142 = vmatpush1.msra.mxu0 %v634
        %1143 = vmatprep.subr.mxu0 0.0
        %1144 = vmatpush1.msra.mxu0 %v637
        %1145 = vmatprep.subr.mxu0 0.0
        %1146 = vmatpush1.msra.mxu0 0.0
        %1147 = vmatprep.subr.mxu0 0.0
        %1148 = vmatpush1.msra.mxu0 0.0
        %1149 = vmatprep.subr.mxu0 0.0
        %1150 = vmatpush1.msra.mxu0 0.0
        %1151 = vmatprep.subr.mxu0 0.0
        %1152 = vmatpush1.msra.mxu0 0.0
        %1153 = vmatprep.subr.mxu0 0.0
        %1154 = vmatpush1.msra.mxu0 0.0
        %1155 = vmatprep.subr.mxu0 0.0
        %1156 = vmatpush1.msra.mxu0 0.0
        %1157 = vmatprep.subr.mxu0 0.0
        %1158 = vmatpush1.msra.mxu0 0.0
        %1159 = vmatprep.subr.mxu0 0.0
        %1160 = vmatpush1.msra.mxu0 0.0
        %1161 = vmatprep.subr.mxu0 0.0
        %1162 = vmatpush1.msra.mxu0 0.0
        %1163 = vmatprep.subr.mxu0 0.0
        %1164 = vmatpush1.msra.mxu0 0.0
        %1165 = vmatprep.subr.mxu0 0.0
        %1166 = vmatpush1.msra.mxu0 0.0
        %1167 = vmatprep.subr.mxu0 0.0
        %1168 = vmatpush1.msra.mxu0 0.0
        %1169 = vmatprep.subr.mxu0 0.0
        %1170 = vmatpush1.msra.mxu0 0.0
        %1171 = vmatprep.subr.mxu0 0.0
        %1172 = vmatpush1.msra.mxu0 0.0
        %1173 = vmatprep.subr.mxu0 0.0
        %1174 = vmatpush1.msra.mxu0 0.0
        %1175 = vmatprep.subr.mxu0 0.0
        %1176 = vmatpush1.msra.mxu0 0.0
        %1177 = vmatprep.subr.mxu0 0.0
        %1178 = vmatpush1.msra.mxu0 0.0
        %1179 = vmatprep.subr.mxu0 0.0
        %1180 = vmatpush1.msra.mxu0 0.0
        %1181 = vmatprep.subr.mxu0 0.0
        %1182 = vmatpush1.msra.mxu0 0.0
        %1183 = vmatprep.subr.mxu0 0.0
        %1184 = vmatpush1.msra.mxu0 0.0
        %1185 = vmatprep.subr.mxu0 0.0
        %1186 = vmatpush1.msra.mxu0 0.0
        %1187 = vmatprep.subr.mxu0 0.0
        %1188 = vmatpush1.msra.mxu0 0.0
        %1189 = vmatprep.subr.mxu0 0.0
        %1190 = vmatpush1.msra.mxu0 0.0
        %1191 = vmatprep.subr.mxu0 0.0
        %1192 = vmatpush1.msra.mxu0 0.0
        %1193 = vmatprep.subr.mxu0 0.0
        %1194 = vmatpush1.msra.mxu0 0.0
        %1195 = vmatprep.subr.mxu0 0.0
        %1196 = vmatpush1.msra.mxu0 0.0
        %1197 = vmatprep.subr.mxu0 0.0
        %1198 = vmatpush1.msra.mxu0 0.0
        %1199 = vmatprep.subr.mxu0 0.0
        %1200 = vmatpush1.msra.mxu0 0.0
        %1201 = vmatprep.subr.mxu0 0.0
        %1202 = vmatpush1.msra.mxu0 0.0
        %1203 = vmatprep.subr.mxu0 0.0
        %1204 = vmatpush1.msra.mxu0 0.0
        %1205 = vmatprep.mubr.f32.mxu0 0.0
        %1206 = vmatmul.mubr.f32.gmra.mrb[0].mxu0 %v1068
        %v1207 = vpop.f32.mrb[0].mxu0
        %v1208 = vadd.f32 0.0, %v1207
        %v1209 = vpop.f32.mrb[0].mxu0
        %1210 = vdwg.mxu0
        %v1211 = vld [vmem:[#allocation5] sm:$0xff]
        %v1212 = vld [vmem:[#allocation5 + $0x8] sm:$0xff]
        %v1213 = vld [vmem:[#allocation5 + $0x10] sm:$0xff]
        %v1214 = vld [vmem:[#allocation5 + $0x18] sm:$0xff]
        %v1215 = vld [vmem:[#allocation5 + $0x20] sm:$0xff]
        %v1216 = vld [vmem:[#allocation5 + $0x28] sm:$0xff]
        %v1217 = vld [vmem:[#allocation5 + $0x30] sm:$0xff]
        %v1218 = vld [vmem:[#allocation5 + $0x38] sm:$0xff]
        %v1219 = vld [vmem:[#allocation5 + $0x40] sm:$0xff]
        %v1220 = vld [vmem:[#allocation5 + $0x48] sm:$0xff]
        %v1221 = vld [vmem:[#allocation5 + $0x50] sm:$0xff]
        %v1222 = vld [vmem:[#allocation5 + $0x58] sm:$0xff]
        %v1223 = vld [vmem:[#allocation5 + $0x60] sm:$0xff]
        %v1224 = vld [vmem:[#allocation5 + $0x68] sm:$0xff]
        %v1225 = vld [vmem:[#allocation5 + $0x70] sm:$0xff]
        %v1226 = vld [vmem:[#allocation5 + $0x78] sm:$0xff]
        %v1227 = vld [vmem:[#allocation5 + $0x80] sm:$0xff]
        %v1228 = vld [vmem:[#allocation5 + $0x88] sm:$0xff]
        %v1229 = vld [vmem:[#allocation5 + $0x90] sm:$0xff]
        %v1230 = vld [vmem:[#allocation5 + $0x98] sm:$0xff]
        %v1231 = vld [vmem:[#allocation5 + $0xa0] sm:$0xff]
        %v1232 = vld [vmem:[#allocation5 + $0xa8] sm:$0xff]
        %v1233 = vld [vmem:[#allocation5 + $0xb0] sm:$0xff]
        %v1234 = vld [vmem:[#allocation5 + $0xb8] sm:$0xff]
        %v1235 = vld [vmem:[#allocation5 + $0xc0] sm:$0xff]
        %v1236 = vld [vmem:[#allocation5 + $0xc8] sm:$0xff]
        %v1237 = vld [vmem:[#allocation5 + $0xd0] sm:$0xff]
        %v1238 = vld [vmem:[#allocation5 + $0xd8] sm:$0xff]
        %v1239 = vld [vmem:[#allocation5 + $0xe0] sm:$0xff]
        %v1240 = vld [vmem:[#allocation5 + $0xe8] sm:$0xff]
        %v1241 = vld [vmem:[#allocation5 + $0xf0] sm:$0xff]
        %v1242 = vld [vmem:[#allocation5 + $0xf8] sm:$0xff]
        %v1243 = vld [vmem:[#allocation5 + $0x100] sm:$0xff]
        %v1244 = vld [vmem:[#allocation5 + $0x108] sm:$0xff]
        %v1245 = vld [vmem:[#allocation5 + $0x110] sm:$0xff]
        %v1246 = vld [vmem:[#allocation5 + $0x118] sm:$0xff]
        %v1247 = vld [vmem:[#allocation5 + $0x120] sm:$0xff]
        %v1248 = vld [vmem:[#allocation5 + $0x128] sm:$0xff]
        %v1249 = vld [vmem:[#allocation5 + $0x130] sm:$0xff]
        %v1250 = vld [vmem:[#allocation5 + $0x138] sm:$0xff]
        %v1251 = vld [vmem:[#allocation5 + $0x140] sm:$0xff]
        %v1252 = vld [vmem:[#allocation5 + $0x148] sm:$0xff]
        %v1253 = vld [vmem:[#allocation5 + $0x150] sm:$0xff]
        %v1254 = vld [vmem:[#allocation5 + $0x158] sm:$0xff]
        %v1255 = vld [vmem:[#allocation5 + $0x160] sm:$0xff]
        %v1256 = vld [vmem:[#allocation5 + $0x168] sm:$0xff]
        %v1257 = vld [vmem:[#allocation5 + $0x170] sm:$0xff]
        %v1258 = vld [vmem:[#allocation5 + $0x178] sm:$0xff]
        %v1259 = vld [vmem:[%s7] sm:$0x1]
        %1260 = vmatprep.subr.mxu0 0.0
        %1261 = vmatpush1.msra.mxu0 %v1211
        %1262 = vmatprep.subr.mxu0 0.0
        %1263 = vmatpush1.msra.mxu0 %v1212
        %1264 = vmatprep.subr.mxu0 0.0
        %1265 = vmatpush1.msra.mxu0 %v1213
        %1266 = vmatprep.subr.mxu0 0.0
        %1267 = vmatpush1.msra.mxu0 %v1214
        %1268 = vmatprep.subr.mxu0 0.0
        %1269 = vmatpush1.msra.mxu0 %v1215
        %1270 = vmatprep.subr.mxu0 0.0
        %1271 = vmatpush1.msra.mxu0 %v1216
        %1272 = vmatprep.subr.mxu0 0.0
        %1273 = vmatpush1.msra.mxu0 %v1217
        %1274 = vmatprep.subr.mxu0 0.0
        %1275 = vmatpush1.msra.mxu0 %v1218
        %1276 = vmatprep.subr.mxu0 0.0
        %1277 = vmatpush1.msra.mxu0 %v1219
        %1278 = vmatprep.subr.mxu0 0.0
        %1279 = vmatpush1.msra.mxu0 %v1220
        %1280 = vmatprep.subr.mxu0 0.0
        %1281 = vmatpush1.msra.mxu0 %v1221
        %1282 = vmatprep.subr.mxu0 0.0
        %1283 = vmatpush1.msra.mxu0 %v1222
        %1284 = vmatprep.subr.mxu0 0.0
        %1285 = vmatpush1.msra.mxu0 %v1223
        %1286 = vmatprep.subr.mxu0 0.0
        %1287 = vmatpush1.msra.mxu0 %v1224
        %1288 = vmatprep.subr.mxu0 0.0
        %1289 = vmatpush1.msra.mxu0 %v1225
        %1290 = vmatprep.subr.mxu0 0.0
        %1291 = vmatpush1.msra.mxu0 %v1226
        %1292 = vmatprep.subr.mxu0 0.0
        %1293 = vmatpush1.msra.mxu0 %v1227
        %1294 = vmatprep.subr.mxu0 0.0
        %1295 = vmatpush1.msra.mxu0 %v1228
        %1296 = vmatprep.subr.mxu0 0.0
        %1297 = vmatpush1.msra.mxu0 %v1229
        %1298 = vmatprep.subr.mxu0 0.0
        %1299 = vmatpush1.msra.mxu0 %v1230
        %1300 = vmatprep.subr.mxu0 0.0
        %1301 = vmatpush1.msra.mxu0 %v1231
        %1302 = vmatprep.subr.mxu0 0.0
        %1303 = vmatpush1.msra.mxu0 %v1232
        %1304 = vmatprep.subr.mxu0 0.0
        %1305 = vmatpush1.msra.mxu0 %v1233
        %1306 = vmatprep.subr.mxu0 0.0
        %1307 = vmatpush1.msra.mxu0 %v1234
        %1308 = vmatprep.subr.mxu0 0.0
        %1309 = vmatpush1.msra.mxu0 %v1235
        %1310 = vmatprep.subr.mxu0 0.0
        %1311 = vmatpush1.msra.mxu0 %v1236
        %1312 = vmatprep.subr.mxu0 0.0
        %1313 = vmatpush1.msra.mxu0 %v1237
        %1314 = vmatprep.subr.mxu0 0.0
        %1315 = vmatpush1.msra.mxu0 %v1238
        %1316 = vmatprep.subr.mxu0 0.0
        %1317 = vmatpush1.msra.mxu0 %v1239
        %1318 = vmatprep.subr.mxu0 0.0
        %1319 = vmatpush1.msra.mxu0 %v1240
        %1320 = vmatprep.subr.mxu0 0.0
        %1321 = vmatpush1.msra.mxu0 %v1241
        %1322 = vmatprep.subr.mxu0 0.0
        %1323 = vmatpush1.msra.mxu0 %v1242
        %1324 = vmatprep.mubr.f32.mxu0 %v1139
        %1325 = vmatmul.mubr.f32.gmra.mrb[0].mxu0 %v1137
        %v1326 = vpop.f32.mrb[0].mxu0
        %v1327 = vadd.f32 %v1259, %v1326
        %v1328 = vpop.f32.mrb[0].mxu0
        %1329 = vdwg.mxu0
        %1330 = vmatprep.subr.mxu0 0.0
        %1331 = vmatpush1.msra.mxu0 %v1243
        %1332 = vmatprep.subr.mxu0 0.0
        %1333 = vmatpush1.msra.mxu0 %v1244
        %1334 = vmatprep.subr.mxu0 0.0
        %1335 = vmatpush1.msra.mxu0 %v1245
        %1336 = vmatprep.subr.mxu0 0.0
        %1337 = vmatpush1.msra.mxu0 %v1246
        %1338 = vmatprep.subr.mxu0 0.0
        %1339 = vmatpush1.msra.mxu0 %v1247
        %1340 = vmatprep.subr.mxu0 0.0
        %1341 = vmatpush1.msra.mxu0 %v1248
        %1342 = vmatprep.subr.mxu0 0.0
        %1343 = vmatpush1.msra.mxu0 %v1249
        %1344 = vmatprep.subr.mxu0 0.0
        %1345 = vmatpush1.msra.mxu0 %v1250
        %1346 = vmatprep.subr.mxu0 0.0
        %1347 = vmatpush1.msra.mxu0 %v1251
        %1348 = vmatprep.subr.mxu0 0.0
        %1349 = vmatpush1.msra.mxu0 %v1252
        %1350 = vmatprep.subr.mxu0 0.0
        %1351 = vmatpush1.msra.mxu0 %v1253
        %1352 = vmatprep.subr.mxu0 0.0
        %1353 = vmatpush1.msra.mxu0 %v1254
        %1354 = vmatprep.subr.mxu0 0.0
        %1355 = vmatpush1.msra.mxu0 %v1255
        %1356 = vmatprep.subr.mxu0 0.0
        %1357 = vmatpush1.msra.mxu0 %v1256
        %1358 = vmatprep.subr.mxu0 0.0
        %1359 = vmatpush1.msra.mxu0 %v1257
        %1360 = vmatprep.subr.mxu0 0.0
        %1361 = vmatpush1.msra.mxu0 %v1258
        %1362 = vmatprep.subr.mxu0 0.0
        %1363 = vmatpush1.msra.mxu0 0.0
        %1364 = vmatprep.subr.mxu0 0.0
        %1365 = vmatpush1.msra.mxu0 0.0
        %1366 = vmatprep.subr.mxu0 0.0
        %1367 = vmatpush1.msra.mxu0 0.0
        %1368 = vmatprep.subr.mxu0 0.0
        %1369 = vmatpush1.msra.mxu0 0.0
        %1370 = vmatprep.subr.mxu0 0.0
        %1371 = vmatpush1.msra.mxu0 0.0
        %1372 = vmatprep.subr.mxu0 0.0
        %1373 = vmatpush1.msra.mxu0 0.0
        %1374 = vmatprep.subr.mxu0 0.0
        %1375 = vmatpush1.msra.mxu0 0.0
        %1376 = vmatprep.subr.mxu0 0.0
        %1377 = vmatpush1.msra.mxu0 0.0
        %1378 = vmatprep.subr.mxu0 0.0
        %1379 = vmatpush1.msra.mxu0 0.0
        %1380 = vmatprep.subr.mxu0 0.0
        %1381 = vmatpush1.msra.mxu0 0.0
        %1382 = vmatprep.subr.mxu0 0.0
        %1383 = vmatpush1.msra.mxu0 0.0
        %1384 = vmatprep.subr.mxu0 0.0
        %1385 = vmatpush1.msra.mxu0 0.0
        %1386 = vmatprep.subr.mxu0 0.0
        %1387 = vmatpush1.msra.mxu0 0.0
        %1388 = vmatprep.subr.mxu0 0.0
        %1389 = vmatpush1.msra.mxu0 0.0
        %1390 = vmatprep.subr.mxu0 0.0
        %1391 = vmatpush1.msra.mxu0 0.0
        %1392 = vmatprep.subr.mxu0 0.0
        %1393 = vmatpush1.msra.mxu0 0.0
        %1394 = vmatprep.mubr.f32.mxu0 0.0
        %1395 = vmatmul.mubr.f32.gmra.mrb[0].mxu0 %v1208
        %v1396 = vpop.f32.mrb[0].mxu0
        %v1397 = vadd.f32 %v1327, %v1396
        %v1398 = vpop.f32.mrb[0].mxu0
        %1399 = vdwg.mxu0
        %v1400 = vmax.f32 %v1397, 0.0
        %v1401 = vld [vmem:[#allocation7] sm:$0xff]
        %v1402 = vld [vmem:[#allocation7 + $0x8] sm:$0xff]
        %v1403 = vld [vmem:[#allocation7 + $0x10] sm:$0xff]
        %v1404 = vld [vmem:[#allocation7 + $0x18] sm:$0xff]
        %v1405 = vld [vmem:[#allocation7 + $0x20] sm:$0xff]
        %v1406 = vld [vmem:[#allocation7 + $0x28] sm:$0xff]
        %v1407 = vld [vmem:[#allocation7 + $0x30] sm:$0xff]
        %v1408 = vld [vmem:[#allocation7 + $0x38] sm:$0xff]
        %v1409 = vld [vmem:[#allocation7 + $0x40] sm:$0xff]
        %v1410 = vld [vmem:[#allocation7 + $0x48] sm:$0xff]
        %v1411 = vld [vmem:[#allocation7 + $0x50] sm:$0xff]
        %v1412 = vld [vmem:[#allocation7 + $0x58] sm:$0xff]
        %v1413 = vld [vmem:[#allocation7 + $0x60] sm:$0xff]
        %v1414 = vld [vmem:[#allocation7 + $0x68] sm:$0xff]
        %v1415 = vld [vmem:[#allocation7 + $0x70] sm:$0xff]
        %v1416 = vld [vmem:[#allocation7 + $0x78] sm:$0xff]
        %v1417 = vld [vmem:[%s9] sm:$0x1]
        %1418 = vmatprep.subr.mxu0 0.0
        %1419 = vmatpush1.msra.mxu0 %v1401
        %1420 = vmatprep.subr.mxu0 0.0
        %1421 = vmatpush1.msra.mxu0 %v1402
        %1422 = vmatprep.subr.mxu0 0.0
        %1423 = vmatpush1.msra.mxu0 %v1403
        %1424 = vmatprep.subr.mxu0 0.0
        %1425 = vmatpush1.msra.mxu0 %v1404
        %1426 = vmatprep.subr.mxu0 0.0
        %1427 = vmatpush1.msra.mxu0 %v1405
        %1428 = vmatprep.subr.mxu0 0.0
        %1429 = vmatpush1.msra.mxu0 %v1406
        %1430 = vmatprep.subr.mxu0 0.0
        %1431 = vmatpush1.msra.mxu0 %v1407
        %1432 = vmatprep.subr.mxu0 0.0
        %1433 = vmatpush1.msra.mxu0 %v1408
        %1434 = vmatprep.subr.mxu0 0.0
        %1435 = vmatpush1.msra.mxu0 %v1409
        %1436 = vmatprep.subr.mxu0 0.0
        %1437 = vmatpush1.msra.mxu0 %v1410
        %1438 = vmatprep.subr.mxu0 0.0
        %1439 = vmatpush1.msra.mxu0 %v1411
        %1440 = vmatprep.subr.mxu0 0.0
        %1441 = vmatpush1.msra.mxu0 %v1412
        %1442 = vmatprep.subr.mxu0 0.0
        %1443 = vmatpush1.msra.mxu0 %v1413
        %1444 = vmatprep.subr.mxu0 0.0
        %1445 = vmatpush1.msra.mxu0 %v1414
        %1446 = vmatprep.subr.mxu0 0.0
        %1447 = vmatpush1.msra.mxu0 %v1415
        %1448 = vmatprep.subr.mxu0 0.0
        %1449 = vmatpush1.msra.mxu0 %v1416
        %1450 = vmatprep.subr.mxu0 0.0
        %1451 = vmatpush1.msra.mxu0 0.0
        %1452 = vmatprep.subr.mxu0 0.0
        %1453 = vmatpush1.msra.mxu0 0.0
        %1454 = vmatprep.subr.mxu0 0.0
        %1455 = vmatpush1.msra.mxu0 0.0
        %1456 = vmatprep.subr.mxu0 0.0
        %1457 = vmatpush1.msra.mxu0 0.0
        %1458 = vmatprep.subr.mxu0 0.0
        %1459 = vmatpush1.msra.mxu0 0.0
        %1460 = vmatprep.subr.mxu0 0.0
        %1461 = vmatpush1.msra.mxu0 0.0
        %1462 = vmatprep.subr.mxu0 0.0
        %1463 = vmatpush1.msra.mxu0 0.0
        %1464 = vmatprep.subr.mxu0 0.0
        %1465 = vmatpush1.msra.mxu0 0.0
        %1466 = vmatprep.subr.mxu0 0.0
        %1467 = vmatpush1.msra.mxu0 0.0
        %1468 = vmatprep.subr.mxu0 0.0
        %1469 = vmatpush1.msra.mxu0 0.0
        %1470 = vmatprep.subr.mxu0 0.0
        %1471 = vmatpush1.msra.mxu0 0.0
        %1472 = vmatprep.subr.mxu0 0.0
        %1473 = vmatpush1.msra.mxu0 0.0
        %1474 = vmatprep.subr.mxu0 0.0
        %1475 = vmatpush1.msra.mxu0 0.0
        %1476 = vmatprep.subr.mxu0 0.0
        %1477 = vmatpush1.msra.mxu0 0.0
        %1478 = vmatprep.subr.mxu0 0.0
        %1479 = vmatpush1.msra.mxu0 0.0
        %1480 = vmatprep.subr.mxu0 0.0
        %1481 = vmatpush1.msra.mxu0 0.0
        %1482 = vmatprep.mubr.f32.mxu0 0.0
        %1483 = vmatmul.mubr.f32.gmra.mrb[0].mxu0 %v1400
        %v1484 = vpop.f32.mrb[0].mxu0
        %v1485 = vadd.f32 %v1417, %v1484
        %v1486 = vpop.f32.mrb[0].mxu0
        %1487 = vdwg.mxu0
        %v1488 = vmax.f32 %v1485, 0.0
        %v1489 = vld [vmem:[#allocation8] sm:$0xff]
        %v1490 = vld [vmem:[#allocation8 + $0x8] sm:$0xff]
        %v1491 = vld [vmem:[#allocation8 + $0x10] sm:$0xff]
        %v1492 = vld [vmem:[#allocation8 + $0x18] sm:$0xff]
        %v1493 = vld [vmem:[#allocation8 + $0x20] sm:$0xff]
        %v1494 = vld [vmem:[#allocation8 + $0x28] sm:$0xff]
        %v1495 = vld [vmem:[#allocation8 + $0x30] sm:$0xff]
        %v1496 = vld [vmem:[#allocation8 + $0x38] sm:$0xff]
        %v1497 = vld [vmem:[#allocation8 + $0x40] sm:$0xff]
        %v1498 = vld [vmem:[#allocation8 + $0x48] sm:$0xff]
        %v1499 = vld [vmem:[#allocation8 + $0x50] sm:$0xff]
        %v1500 = vld [vmem:[#allocation8 + $0x58] sm:$0xff]
        %v1501 = vld [vmem:[#allocation8 + $0x60] sm:$0xff]
        %v1502 = vld [vmem:[#allocation8 + $0x68] sm:$0xff]
        %v1503 = vld [vmem:[#allocation8 + $0x70] sm:$0xff]
        %v1504 = vld [vmem:[#allocation8 + $0x78] sm:$0xff]
        %v1505 = vld [vmem:[%s11] sm:$0x1]
        %1506 = vmatprep.subr.mxu0 0.0
        %1507 = vmatpush1.msra.mxu0 %v1489
        %1508 = vmatprep.subr.mxu0 0.0
        %1509 = vmatpush1.msra.mxu0 %v1490
        %1510 = vmatprep.subr.mxu0 0.0
        %1511 = vmatpush1.msra.mxu0 %v1491
        %1512 = vmatprep.subr.mxu0 0.0
        %1513 = vmatpush1.msra.mxu0 %v1492
        %1514 = vmatprep.subr.mxu0 0.0
        %1515 = vmatpush1.msra.mxu0 %v1493
        %1516 = vmatprep.subr.mxu0 0.0
        %1517 = vmatpush1.msra.mxu0 %v1494
        %1518 = vmatprep.subr.mxu0 0.0
        %1519 = vmatpush1.msra.mxu0 %v1495
        %1520 = vmatprep.subr.mxu0 0.0
        %1521 = vmatpush1.msra.mxu0 %v1496
        %1522 = vmatprep.subr.mxu0 0.0
        %1523 = vmatpush1.msra.mxu0 %v1497
        %1524 = vmatprep.subr.mxu0 0.0
        %1525 = vmatpush1.msra.mxu0 %v1498
        %1526 = vmatprep.subr.mxu0 0.0
        %1527 = vmatpush1.msra.mxu0 %v1499
        %1528 = vmatprep.subr.mxu0 0.0
        %1529 = vmatpush1.msra.mxu0 %v1500
        %1530 = vmatprep.subr.mxu0 0.0
        %1531 = vmatpush1.msra.mxu0 %v1501
        %1532 = vmatprep.subr.mxu0 0.0
        %1533 = vmatpush1.msra.mxu0 %v1502
        %1534 = vmatprep.subr.mxu0 0.0
        %1535 = vmatpush1.msra.mxu0 %v1503
        %1536 = vmatprep.subr.mxu0 0.0
        %1537 = vmatpush1.msra.mxu0 %v1504
        %1538 = vmatprep.subr.mxu0 0.0
        %1539 = vmatpush1.msra.mxu0 0.0
        %1540 = vmatprep.subr.mxu0 0.0
        %1541 = vmatpush1.msra.mxu0 0.0
        %1542 = vmatprep.subr.mxu0 0.0
        %1543 = vmatpush1.msra.mxu0 0.0
        %1544 = vmatprep.subr.mxu0 0.0
        %1545 = vmatpush1.msra.mxu0 0.0
        %1546 = vmatprep.subr.mxu0 0.0
        %1547 = vmatpush1.msra.mxu0 0.0
        %1548 = vmatprep.subr.mxu0 0.0
        %1549 = vmatpush1.msra.mxu0 0.0
        %1550 = vmatprep.subr.mxu0 0.0
        %1551 = vmatpush1.msra.mxu0 0.0
        %1552 = vmatprep.subr.mxu0 0.0
        %1553 = vmatpush1.msra.mxu0 0.0
        %1554 = vmatprep.subr.mxu0 0.0
        %1555 = vmatpush1.msra.mxu0 0.0
        %1556 = vmatprep.subr.mxu0 0.0
        %1557 = vmatpush1.msra.mxu0 0.0
        %1558 = vmatprep.subr.mxu0 0.0
        %1559 = vmatpush1.msra.mxu0 0.0
        %1560 = vmatprep.subr.mxu0 0.0
        %1561 = vmatpush1.msra.mxu0 0.0
        %1562 = vmatprep.subr.mxu0 0.0
        %1563 = vmatpush1.msra.mxu0 0.0
        %1564 = vmatprep.subr.mxu0 0.0
        %1565 = vmatpush1.msra.mxu0 0.0
        %1566 = vmatprep.subr.mxu0 0.0
        %1567 = vmatpush1.msra.mxu0 0.0
        %1568 = vmatprep.subr.mxu0 0.0
        %1569 = vmatpush1.msra.mxu0 0.0
        %1570 = vmatprep.mubr.f32.mxu0 0.0
        %1571 = vmatmul.mubr.f32.gmra.mrb[0].mxu0 %v1488
        %v1572 = vpop.f32.mrb[0].mxu0
        %v1573 = vadd.f32 %v1505, %v1572
        %v1574 = vpop.f32.mrb[0].mxu0
        %1575 = vdwg.mxu0
        %v1576 = vmax.f32 %v1573, 0.0
        %v1577 = vld [vmem:[#allocation10] sm:$0xff]
        %v1578 = vld [vmem:[#allocation10 + $0x8] sm:$0xff]
        %v1579 = vld [vmem:[#allocation10 + $0x10] sm:$0xff]
        %v1580 = vld [vmem:[#allocation10 + $0x18] sm:$0xff]
        %v1581 = vld [vmem:[#allocation10 + $0x20] sm:$0xff]
        %v1582 = vld [vmem:[#allocation10 + $0x28] sm:$0xff]
        %v1583 = vld [vmem:[#allocation10 + $0x30] sm:$0xff]
        %v1584 = vld [vmem:[#allocation10 + $0x38] sm:$0xff]
        %v1585 = vld [vmem:[#allocation10 + $0x40] sm:$0xff]
        %v1586 = vld [vmem:[#allocation10 + $0x48] sm:$0xff]
        %v1587 = vld [vmem:[#allocation10 + $0x50] sm:$0xff]
        %v1588 = vld [vmem:[#allocation10 + $0x58] sm:$0xff]
        %v1589 = vld [vmem:[#allocation10 + $0x60] sm:$0xff]
        %v1590 = vld [vmem:[#allocation10 + $0x68] sm:$0xff]
        %v1591 = vld [vmem:[#allocation10 + $0x70] sm:$0xff]
        %v1592 = vld [vmem:[#allocation10 + $0x78] sm:$0xff]
        %v1593 = vld [vmem:[%s13] sm:$0x1]
        %1594 = vmatprep.subr.mxu0 0.0
        %1595 = vmatpush1.msra.mxu0 %v1577
        %1596 = vmatprep.subr.mxu0 0.0
        %1597 = vmatpush1.msra.mxu0 %v1578
        %1598 = vmatprep.subr.mxu0 0.0
        %1599 = vmatpush1.msra.mxu0 %v1579
        %1600 = vmatprep.subr.mxu0 0.0
        %1601 = vmatpush1.msra.mxu0 %v1580
        %1602 = vmatprep.subr.mxu0 0.0
        %1603 = vmatpush1.msra.mxu0 %v1581
        %1604 = vmatprep.subr.mxu0 0.0
        %1605 = vmatpush1.msra.mxu0 %v1582
        %1606 = vmatprep.subr.mxu0 0.0
        %1607 = vmatpush1.msra.mxu0 %v1583
        %1608 = vmatprep.subr.mxu0 0.0
        %1609 = vmatpush1.msra.mxu0 %v1584
        %1610 = vmatprep.subr.mxu0 0.0
        %1611 = vmatpush1.msra.mxu0 %v1585
        %1612 = vmatprep.subr.mxu0 0.0
        %1613 = vmatpush1.msra.mxu0 %v1586
        %1614 = vmatprep.subr.mxu0 0.0
        %1615 = vmatpush1.msra.mxu0 %v1587
        %1616 = vmatprep.subr.mxu0 0.0
        %1617 = vmatpush1.msra.mxu0 %v1588
        %1618 = vmatprep.subr.mxu0 0.0
        %1619 = vmatpush1.msra.mxu0 %v1589
        %1620 = vmatprep.subr.mxu0 0.0
        %1621 = vmatpush1.msra.mxu0 %v1590
        %1622 = vmatprep.subr.mxu0 0.0
        %1623 = vmatpush1.msra.mxu0 %v1591
        %1624 = vmatprep.subr.mxu0 0.0
        %1625 = vmatpush1.msra.mxu0 %v1592
        %1626 = vmatprep.subr.mxu0 0.0
        %1627 = vmatpush1.msra.mxu0 0.0
        %1628 = vmatprep.subr.mxu0 0.0
        %1629 = vmatpush1.msra.mxu0 0.0
        %1630 = vmatprep.subr.mxu0 0.0
        %1631 = vmatpush1.msra.mxu0 0.0
        %1632 = vmatprep.subr.mxu0 0.0
        %1633 = vmatpush1.msra.mxu0 0.0
        %1634 = vmatprep.subr.mxu0 0.0
        %1635 = vmatpush1.msra.mxu0 0.0
        %1636 = vmatprep.subr.mxu0 0.0
        %1637 = vmatpush1.msra.mxu0 0.0
        %1638 = vmatprep.subr.mxu0 0.0
        %1639 = vmatpush1.msra.mxu0 0.0
        %1640 = vmatprep.subr.mxu0 0.0
        %1641 = vmatpush1.msra.mxu0 0.0
        %1642 = vmatprep.subr.mxu0 0.0
        %1643 = vmatpush1.msra.mxu0 0.0
        %1644 = vmatprep.subr.mxu0 0.0
        %1645 = vmatpush1.msra.mxu0 0.0
        %1646 = vmatprep.subr.mxu0 0.0
        %1647 = vmatpush1.msra.mxu0 0.0
        %1648 = vmatprep.subr.mxu0 0.0
        %1649 = vmatpush1.msra.mxu0 0.0
        %1650 = vmatprep.subr.mxu0 0.0
        %1651 = vmatpush1.msra.mxu0 0.0
        %1652 = vmatprep.subr.mxu0 0.0
        %1653 = vmatpush1.msra.mxu0 0.0
        %1654 = vmatprep.subr.mxu0 0.0
        %1655 = vmatpush1.msra.mxu0 0.0
        %1656 = vmatprep.subr.mxu0 0.0
        %1657 = vmatpush1.msra.mxu0 0.0
        %1658 = vmatprep.mubr.f32.mxu0 0.0
        %1659 = vmatmul.mubr.f32.gmra.mrb[0].mxu0 %v1576
        %v1660 = vpop.f32.mrb[0].mxu0
        %v1661 = vadd.f32 %v1593, %v1660
        %v1662 = vpop.f32.mrb[0].mxu0
        %1663 = vdwg.mxu0
        %v1664 = vmax.f32 %v1661, 0.0
        %v1665 = vld [vmem:[#allocation11] sm:$0xff]
        %v1666 = vld [vmem:[#allocation11 + $0x8] sm:$0xff]
        %v1667 = vld [vmem:[#allocation11 + $0x10] sm:$0xff]
        %v1668 = vld [vmem:[#allocation11 + $0x18] sm:$0xff]
        %v1669 = vld [vmem:[#allocation11 + $0x20] sm:$0xff]
        %v1670 = vld [vmem:[#allocation11 + $0x28] sm:$0xff]
        %v1671 = vld [vmem:[#allocation11 + $0x30] sm:$0xff]
        %v1672 = vld [vmem:[#allocation11 + $0x38] sm:$0xff]
        %v1673 = vld [vmem:[#allocation11 + $0x40] sm:$0xff]
        %v1674 = vld [vmem:[#allocation11 + $0x48] sm:$0xff]
        %v1675 = vld [vmem:[#allocation11 + $0x50] sm:$0xff]
        %v1676 = vld [vmem:[#allocation11 + $0x58] sm:$0xff]
        %v1677 = vld [vmem:[#allocation11 + $0x60] sm:$0xff]
        %v1678 = vld [vmem:[#allocation11 + $0x68] sm:$0xff]
        %v1679 = vld [vmem:[#allocation11 + $0x70] sm:$0xff]
        %v1680 = vld [vmem:[#allocation11 + $0x78] sm:$0xff]
        %v1681 = vld [vmem:[%s15] sm:$0x1]
        %1682 = vmatprep.subr.mxu0 0.0
        %1683 = vmatpush1.msra.mxu0 %v1665
        %1684 = vmatprep.subr.mxu0 0.0
        %1685 = vmatpush1.msra.mxu0 %v1666
        %1686 = vmatprep.subr.mxu0 0.0
        %1687 = vmatpush1.msra.mxu0 %v1667
        %1688 = vmatprep.subr.mxu0 0.0
        %1689 = vmatpush1.msra.mxu0 %v1668
        %1690 = vmatprep.subr.mxu0 0.0
        %1691 = vmatpush1.msra.mxu0 %v1669
        %1692 = vmatprep.subr.mxu0 0.0
        %1693 = vmatpush1.msra.mxu0 %v1670
        %1694 = vmatprep.subr.mxu0 0.0
        %1695 = vmatpush1.msra.mxu0 %v1671
        %1696 = vmatprep.subr.mxu0 0.0
        %1697 = vmatpush1.msra.mxu0 %v1672
        %1698 = vmatprep.subr.mxu0 0.0
        %1699 = vmatpush1.msra.mxu0 %v1673
        %1700 = vmatprep.subr.mxu0 0.0
        %1701 = vmatpush1.msra.mxu0 %v1674
        %1702 = vmatprep.subr.mxu0 0.0
        %1703 = vmatpush1.msra.mxu0 %v1675
        %1704 = vmatprep.subr.mxu0 0.0
        %1705 = vmatpush1.msra.mxu0 %v1676
        %1706 = vmatprep.subr.mxu0 0.0
        %1707 = vmatpush1.msra.mxu0 %v1677
        %1708 = vmatprep.subr.mxu0 0.0
        %1709 = vmatpush1.msra.mxu0 %v1678
        %1710 = vmatprep.subr.mxu0 0.0
        %1711 = vmatpush1.msra.mxu0 %v1679
        %1712 = vmatprep.subr.mxu0 0.0
        %1713 = vmatpush1.msra.mxu0 %v1680
        %1714 = vmatprep.subr.mxu0 0.0
        %1715 = vmatpush1.msra.mxu0 0.0
        %1716 = vmatprep.subr.mxu0 0.0
        %1717 = vmatpush1.msra.mxu0 0.0
        %1718 = vmatprep.subr.mxu0 0.0
        %1719 = vmatpush1.msra.mxu0 0.0
        %1720 = vmatprep.subr.mxu0 0.0
        %1721 = vmatpush1.msra.mxu0 0.0
        %1722 = vmatprep.subr.mxu0 0.0
        %1723 = vmatpush1.msra.mxu0 0.0
        %1724 = vmatprep.subr.mxu0 0.0
        %1725 = vmatpush1.msra.mxu0 0.0
        %1726 = vmatprep.subr.mxu0 0.0
        %1727 = vmatpush1.msra.mxu0 0.0
        %1728 = vmatprep.subr.mxu0 0.0
        %1729 = vmatpush1.msra.mxu0 0.0
        %1730 = vmatprep.subr.mxu0 0.0
        %1731 = vmatpush1.msra.mxu0 0.0
        %1732 = vmatprep.subr.mxu0 0.0
        %1733 = vmatpush1.msra.mxu0 0.0
        %1734 = vmatprep.subr.mxu0 0.0
        %1735 = vmatpush1.msra.mxu0 0.0
        %1736 = vmatprep.subr.mxu0 0.0
        %1737 = vmatpush1.msra.mxu0 0.0
        %1738 = vmatprep.subr.mxu0 0.0
        %1739 = vmatpush1.msra.mxu0 0.0
        %1740 = vmatprep.subr.mxu0 0.0
        %1741 = vmatpush1.msra.mxu0 0.0
        %1742 = vmatprep.subr.mxu0 0.0
        %1743 = vmatpush1.msra.mxu0 0.0
        %1744 = vmatprep.subr.mxu0 0.0
        %1745 = vmatpush1.msra.mxu0 0.0
        %1746 = vmatprep.mubr.f32.mxu0 0.0
        %1747 = vmatmul.mubr.f32.gmra.mrb[0].mxu0 %v1664
        %v1748 = vpop.f32.mrb[0].mxu0
        %v1749 = vadd.f32 %v1681, %v1748
        %v1750 = vpop.f32.mrb[0].mxu0
        %1751 = vdwg.mxu0
        %1752 = vst [vmem:[%s626] sm:$0x1] %v1749
        %s1753 = sand.u32 %s390, 1
        %s1754 = scalar_lea.sflag [#allocation4], %s1753
        %s1755 = sand.u32 %s390, 1
        %s1756 = scalar_lea.vmem [#allocation13], %s1755
        // Predicated region
        $region109: #{tpu_custom_call.1} parent=83 // pred_check
          %p1757 = pneg %p400
        $region110: #{tpu_custom_call.1} parent=83 // pred_check_branch
          %1759 = sbr.rel (%p1757) target = $region112
        $region111: #{tpu_custom_call.1} parent=83 // pred_region
          %s1761 = ssub.s32 16, 16
          %1762 = vsyncadd %s1754, %s1761
          %s1763 = smul.addr %s36, 16
          %s1764 = scalar_lea.hbm %s16, %s1763
          %s1766 = sshll.u32 %s1756, 4
          %s1767 = int_to_ptr.vmem [resolvable:$true] %s1766
          %1769 = dma.vmem_to_hbm [thread:$0]  %s1767, 16, %s1764, %s1754
        $region112: #{tpu_custom_call.1} parent=83 // pred_fallthru
          _
      $region84: #{tpu_custom_call.1} parent=5 // pred_fallthru
        _
      %p1770 = scmp.le.s32.totalorder 2, %s31
      // Predicated region
      $region113: #{tpu_custom_call.1} parent=5 // pred_check
        %p1771 = pneg %p1770
      $region114: #{tpu_custom_call.1} parent=5 // pred_check_branch
        %1773 = sbr.rel (%p1771) target = $region116
      $region115: #{tpu_custom_call.1} parent=5 // pred_region
        %s1774 = ssub.s32 %s31, 2
        // Predicated region
        $region117: #{tpu_custom_call.1} parent=115 // pred_check
          %p1775 = pneg %p406
        $region118: #{tpu_custom_call.1} parent=115 // pred_check_branch
          %1777 = sbr.rel (%p1775) target = $region120
        $region119: #{tpu_custom_call.1} parent=115 // pred_region
          %s1778 = sand.u32 %s391, 1
          %s1779 = scalar_lea.sflag [#allocation4], %s1778
          %s1780 = sand.u32 %s391, 1
          %s1781 = scalar_lea.vmem [#allocation13], %s1780
          %1782 = dma.done %s1779, 16
        $region120: #{tpu_custom_call.1} parent=115 // pred_fallthru
          _
      $region116: #{tpu_custom_call.1} parent=5 // pred_fallthru
        _
    $region6: #{tpu_custom_call.1} parent=1 // loop_footer
      %s35 = sadd.s32 1, %s31
    $region7: #{tpu_custom_call.1} parent=1 // loop_footer_branch
      %30 = sbr.rel target = $region3
    $region8: #{tpu_custom_call.1} parent=1 // loop_exit
      _
    %1783 = vsyncpa [#allocation3], 1
    %s1784 = scalar_lea.sflag [#allocation3], 1
    %1785 = vsyncpa %s1784, 1
    %1786 = vsyncpa [#allocation6], 1
    %1787 = vsyncpa [#allocation9], 1
    %1788 = vsyncpa [#allocation12], 1
    %1789 = vsyncpa [#allocation4], 1
    %s1790 = scalar_lea.sflag [#allocation4], 1
    %1791 = vsyncpa %s1790, 1

</llo_original>
